<compile_context>
chip_gen: v7x
topology: tpu7x:2x2x1
jax: 0.10.0
libtpu: 0.0.40
codegen_flags: <defaults>
</compile_context>

<pallas_src>
import math
import jax
import jax.numpy as jnp
from jax import lax
from jax.experimental import pallas as pl
from jax.experimental.pallas import tpu as pltpu

# ---- hyperparameters (small, consistent with the BERT.py globals) ----
d_model = 32
d_ff = 64
d_k = 8
d_v = 8          # packing below assumes d_v == d_k (true for this model)
n_heads = 4
SEQ = 8
BATCH = 2
LN_EPS = 1e-5


def encoder_layer_kernel(x_ref, mask_ref, wqkv_ref, bqkv_ref, wo_ref,
                         w1_ref, w2_ref, vec_ref, out_ref, attn_ref):
    BS, D = x_ref.shape            # [B*S, d_model]
    B, S, _ = mask_ref.shape       # [B, S, S], 1.0 == masked
    H, dk, dv, dff = n_heads, d_k, d_v, d_ff

    x = x_ref[...]                 # [B*S, D]

    vp = vec_ref[...]              # [8, d_ff] packed small vectors
    b_o = vp[0:1, :D]
    gamma = vp[1:2, :D]
    beta = vp[2:3, :D]
    b2 = vp[3:4, :D]
    b1 = vp[4:5, :dff]

    # ---- fused Q/K/V projection: ONE lane-dense MXU matmul [B*S,D] @ [D,3*H*dk] ----
    # (1/sqrt(d_k) is already folded into the Q columns / bias at repack time)
    qkv = jnp.dot(x, wqkv_ref[...], preferred_element_type=jnp.float32) + bqkv_ref[...]  # [B*S, 3*H*dk]

    # lazily slice per-head Q/K/V out of the lane-packed slab; the narrow 8-lane layout
    # only exists where the per-head S x S attention math strictly needs it.
    def split_heads(base, dh):
        # -> [H*B, S, dh], combined index g = h*B + b (leading-dim ops only, no lane relayout
        #    beyond the unavoidable per-head column slice)
        return jnp.concatenate(
            [qkv[:, base + h * dh: base + (h + 1) * dh].reshape(B, S, dh) for h in range(H)],
            axis=0)

    qh = split_heads(0, dk)            # [H*B, S, dk]
    kh = split_heads(H * dk, dk)       # [H*B, S, dk]
    vh = split_heads(2 * H * dk, dv)   # [H*B, S, dv]

    # ---- scaled dot-product attention for all (head, batch) pairs at once ----
    scores = jnp.einsum('gqd,gkd->gqk', qh, kh,
                        preferred_element_type=jnp.float32)               # [H*B, S, S]
    scores = scores.reshape(H, B, S, S)                                   # leading split: free
    scores = jnp.where(mask_ref[...][None] > 0.0, jnp.float32(-1e9), scores)  # in-place broadcast

    m = jnp.max(scores, axis=-1, keepdims=True)
    e = jnp.exp(scores - m)
    s = jnp.sum(e, axis=-1, keepdims=True)
    inv = pl.reciprocal(s, approx=True)          # EUP slot
    inv = inv * (2.0 - s * inv)                  # one Newton step -> f32-accurate
    attn = (e * inv).reshape(H * B, S, S)        # [H*B, S, S]
    attn_ref[...] = attn                         # single packed store (g = h*B + b)

    ctx = jnp.einsum('gqk,gkd->gqd', attn, vh,
                     preferred_element_type=jnp.float32)                  # [H*B, S, dv]

    # lane-pack heads back: ctx2d[b*S+s, h*dv+d] = ctx[h*B+b, s, d]
    ctx2d = jnp.concatenate(
        [ctx[h * B:(h + 1) * B].reshape(BS, dv) for h in range(H)], axis=1)   # [B*S, H*dv]

    # ---- output projection: ONE [B*S, H*dv] @ [H*dv, D] matmul ----
    proj = jnp.dot(ctx2d, wo_ref[...], preferred_element_type=jnp.float32) + b_o   # [B*S, D]

    # ---- residual + LayerNorm(d_model) ----
    y = proj + x
    mean = jnp.mean(y, axis=-1, keepdims=True)
    var = jnp.mean((y - mean) * (y - mean), axis=-1, keepdims=True)
    y_ln = (y - mean) * lax.rsqrt(var + LN_EPS) * gamma + beta

    # ---- position-wise feed-forward: fc2(gelu(fc1(x))), exact erf GELU ----
    h1 = jnp.dot(y_ln, w1_ref[...], preferred_element_type=jnp.float32) + b1
    gact = h1 * 0.5 * (1.0 + lax.erf(h1 * 0.7071067811865476))
    out_ref[...] = jnp.dot(gact, w2_ref[...], preferred_element_type=jnp.float32) + b2


def pack_params(params):
    """One-time parameter repacking (hoisted out of the per-call path)."""
    (wq, bq, wk, bk, wv, bv, wo, bo, gamma, beta, w1, b1, w2, b2) = params
    scale = jnp.float32(1.0 / math.sqrt(d_k))
    # fold the 1/sqrt(d_k) score scale into the Q projection
    wqkv = jnp.concatenate([wq * scale, wk, wv], axis=1)      # [D, 3*H*dk] = [32, 96]
    bqkv = jnp.concatenate([bq * scale, bk, bv], axis=1)      # [1, 3*H*dk] = [1, 96]

    def pad_row(v):                                           # [1, n] -> [1, d_ff]
        return jnp.pad(v, ((0, 0), (0, d_ff - v.shape[1])))

    vec_pack = jnp.concatenate(
        [pad_row(bo), pad_row(gamma), pad_row(beta), pad_row(b2), pad_row(b1),
         jnp.zeros((3, d_ff), jnp.float32)], axis=0)          # [8, d_ff]
    return (wqkv, bqkv, wo, w1, w2, vec_pack)


@jax.jit
def encoder_layer(x, mask, packed):
    wqkv, bqkv, wo, w1, w2, vec_pack = packed
    B, S, D = x.shape
    H = n_heads
    x_flat = x.reshape(B * S, D)

    out_flat, attn_g = pl.pallas_call(
        encoder_layer_kernel,
        out_shape=(
            jax.ShapeDtypeStruct((B * S, D), jnp.float32),
            jax.ShapeDtypeStruct((H * B, S, S), jnp.float32),
        ),
        grid_spec=pltpu.PrefetchScalarGridSpec(
            num_scalar_prefetch=0,
            grid=(1,),                                   # whole batch in one invocation
            in_specs=[
                pl.BlockSpec((B * S, D), lambda i: (0, 0)),            # x (flattened)
                pl.BlockSpec((B, S, S), lambda i: (0, 0, 0)),          # mask
                pl.BlockSpec((D, 3 * H * d_k), lambda i: (0, 0)),      # fused W_Q|W_K|W_V
                pl.BlockSpec((1, 3 * H * d_k), lambda i: (0, 0)),      # fused b_Q|b_K|b_V
                pl.BlockSpec((H * d_v, D), lambda i: (0, 0)),          # W_O
                pl.BlockSpec((D, d_ff), lambda i: (0, 0)),             # W1
                pl.BlockSpec((d_ff, D), lambda i: (0, 0)),             # W2
                pl.BlockSpec((8, d_ff), lambda i: (0, 0)),             # packed b_O|gamma|beta|b2|b1
            ],
            out_specs=(
                pl.BlockSpec((B * S, D), lambda i: (0, 0)),
                pl.BlockSpec((H * B, S, S), lambda i: (0, 0, 0)),
            ),
        ),
        compiler_params=pltpu.CompilerParams(dimension_semantics=("arbitrary",)),
    )(x_flat, mask, wqkv, bqkv, wo, w1, w2, vec_pack)

    enc_out = out_flat.reshape(B, S, D)
    attn = attn_g.reshape(H, B, S, S).transpose(1, 0, 2, 3)    # [B, H, S, S]
    return enc_out, attn


def reference(x, mask, params):
    (wq, bq, wk, bk, wv, bv, wo, bo, gamma, beta, w1, b1, w2, b2) = params
    B, S, D = x.shape
    q = (x @ wq + bq).reshape(B, S, n_heads, d_k).transpose(0, 2, 1, 3)
    k = (x @ wk + bk).reshape(B, S, n_heads, d_k).transpose(0, 2, 1, 3)
    v = (x @ wv + bv).reshape(B, S, n_heads, d_v).transpose(0, 2, 1, 3)
    scores = jnp.einsum("bhqd,bhkd->bhqk", q, k) / math.sqrt(d_k)
    m4 = (mask[:, None, :, :] > 0.0)
    scores = jnp.where(m4, -1e9, scores)
    attn = jax.nn.softmax(scores, axis=-1)
    ctx = jnp.einsum("bhqk,bhkd->bhqd", attn, v).transpose(0, 2, 1, 3).reshape(B, S, n_heads * d_v)
    out = ctx @ wo + bo
    y = out + x
    mean = y.mean(-1, keepdims=True)
    var = ((y - mean) ** 2).mean(-1, keepdims=True)
    y_ln = (y - mean) / jnp.sqrt(var + LN_EPS) * gamma[0] + beta[0]
    h1 = y_ln @ w1 + b1
    g = h1 * 0.5 * (1.0 + lax.erf(h1 / math.sqrt(2.0)))
    return g @ w2 + b2, attn


if __name__ == "__main__":
    key = jax.random.PRNGKey(0)
    ks = jax.random.split(key, 12)

    def nrm(k, shape, scale=0.02):
        return (scale * jax.random.normal(k, shape)).astype(jnp.float32)

    params = (
        nrm(ks[0], (d_model, n_heads * d_k)), nrm(ks[1], (1, n_heads * d_k)),   # W_Q, b_Q
        nrm(ks[2], (d_model, n_heads * d_k)), nrm(ks[3], (1, n_heads * d_k)),   # W_K, b_K
        nrm(ks[4], (d_model, n_heads * d_v)), nrm(ks[5], (1, n_heads * d_v)),   # W_V, b_V
        nrm(ks[6], (n_heads * d_v, d_model)), nrm(ks[7], (1, d_model)),         # W_O, b_O
        jnp.ones((1, d_model), jnp.float32),  jnp.zeros((1, d_model), jnp.float32),  # LN gamma, beta
        nrm(ks[8], (d_model, d_ff)),          nrm(ks[9], (1, d_ff)),            # fc1
        nrm(ks[10], (d_ff, d_model)),         nrm(ks[11], (1, d_model)),        # fc2
    )

    # one-time weight repacking (not part of the per-call path)
    packed = pack_params(params)
    packed = jax.block_until_ready(packed)

    x = jax.random.normal(jax.random.PRNGKey(42), (BATCH, SEQ, d_model), jnp.float32)
    # padding mask: batch 0 masks last 2 key positions, batch 1 masks last 3 (broadcast over queries)
    key_pad = jnp.stack([
        jnp.concatenate([jnp.zeros(SEQ - 2), jnp.ones(2)]),
        jnp.concatenate([jnp.zeros(SEQ - 3), jnp.ones(3)]),
    ]).astype(jnp.float32)                                  # [B, S]
    mask = jnp.broadcast_to(key_pad[:, None, :], (BATCH, SEQ, SEQ)).astype(jnp.float32)

    enc_out, attn_out = encoder_layer(x, mask, packed)
    jax.block_until_ready((enc_out, attn_out))

    ref_out, ref_attn = reference(x, mask, params)
    assert jnp.allclose(enc_out, ref_out, rtol=1e-4, atol=1e-4), "enc_outputs mismatch"
    assert jnp.allclose(attn_out, ref_attn, rtol=1e-4, atol=1e-4), "attn mismatch"

    print("KERNEL_OK")
</pallas_src>

<mosaic_0001>
module attributes {stable_mosaic.version = 11 : i64} {
  func.func @encoder_layer_kernel(%arg0: i32, %arg1: memref<16x32xf32, #tpu.memory_space<vmem>>, %arg2: memref<2x8x8xf32, #tpu.memory_space<vmem>>, %arg3: memref<32x96xf32, #tpu.memory_space<vmem>>, %arg4: memref<1x96xf32, #tpu.memory_space<vmem>>, %arg5: memref<32x32xf32, #tpu.memory_space<vmem>>, %arg6: memref<32x64xf32, #tpu.memory_space<vmem>>, %arg7: memref<64x32xf32, #tpu.memory_space<vmem>>, %arg8: memref<8x64xf32, #tpu.memory_space<vmem>>, %arg9: memref<16x32xf32, #tpu.memory_space<vmem>>, %arg10: memref<8x8x8xf32, #tpu.memory_space<vmem>>) attributes {dimension_semantics = [#tpu.dimension_semantics<arbitrary>], iteration_bounds = array<i64: 1>, scalar_prefetch = 0 : i64, scratch_operands = 0 : i64, tpu.core_type = #tpu.core_type<tc>, window_params = [{pipeline_mode = #tpu.pipeline_mode<synchronous>, transform_indices = @transform_0, window_bounds = array<i64: 16, 32>}, {pipeline_mode = #tpu.pipeline_mode<synchronous>, transform_indices = @transform_1, window_bounds = array<i64: 2, 8, 8>}, {pipeline_mode = #tpu.pipeline_mode<synchronous>, transform_indices = @transform_2, window_bounds = array<i64: 32, 96>}, {pipeline_mode = #tpu.pipeline_mode<synchronous>, transform_indices = @transform_3, window_bounds = array<i64: 1, 96>}, {pipeline_mode = #tpu.pipeline_mode<synchronous>, transform_indices = @transform_4, window_bounds = array<i64: 32, 32>}, {pipeline_mode = #tpu.pipeline_mode<synchronous>, transform_indices = @transform_5, window_bounds = array<i64: 32, 64>}, {pipeline_mode = #tpu.pipeline_mode<synchronous>, transform_indices = @transform_6, window_bounds = array<i64: 64, 32>}, {pipeline_mode = #tpu.pipeline_mode<synchronous>, transform_indices = @transform_7, window_bounds = array<i64: 8, 64>}, {pipeline_mode = #tpu.pipeline_mode<synchronous>, transform_indices = @transform_8, window_bounds = array<i64: 16, 32>}, {pipeline_mode = #tpu.pipeline_mode<synchronous>, transform_indices = @transform_9, window_bounds = array<i64: 8, 8, 8>}]} {
    %c0 = arith.constant 0 : index
    %c0_0 = arith.constant 0 : index
    %0 = vector.load %arg1[%c0, %c0_0] : memref<16x32xf32, #tpu.memory_space<vmem>>, vector<16x32xf32>
    %c0_1 = arith.constant 0 : index
    %c0_2 = arith.constant 0 : index
    %1 = vector.load %arg8[%c0_1, %c0_2] : memref<8x64xf32, #tpu.memory_space<vmem>>, vector<8x64xf32>
    %2 = vector.extract_strided_slice %1 {offsets = [0, 0], sizes = [1, 32], strides = [1, 1]} : vector<8x64xf32> to vector<1x32xf32>
    %3 = vector.extract_strided_slice %1 {offsets = [1, 0], sizes = [1, 32], strides = [1, 1]} : vector<8x64xf32> to vector<1x32xf32>
    %4 = vector.extract_strided_slice %1 {offsets = [2, 0], sizes = [1, 32], strides = [1, 1]} : vector<8x64xf32> to vector<1x32xf32>
    %5 = vector.extract_strided_slice %1 {offsets = [3, 0], sizes = [1, 32], strides = [1, 1]} : vector<8x64xf32> to vector<1x32xf32>
    %6 = vector.extract_strided_slice %1 {offsets = [4, 0], sizes = [1, 64], strides = [1, 1]} : vector<8x64xf32> to vector<1x64xf32>
    %c0_3 = arith.constant 0 : index
    %c0_4 = arith.constant 0 : index
    %7 = vector.load %arg3[%c0_3, %c0_4] : memref<32x96xf32, #tpu.memory_space<vmem>>, vector<32x96xf32>
    %cst = arith.constant dense<0.000000e+00> : vector<16x96xf32>
    %8 = tpu.matmul %0, %7, %cst {dimension_numbers = #tpu.dot_dimension_numbers<[1], [0], [0], [1], [0, 0, 1, 1], [], []>} : vector<16x32xf32>, vector<32x96xf32>, vector<16x96xf32> -> vector<16x96xf32>
    %c0_5 = arith.constant 0 : index
    %c0_6 = arith.constant 0 : index
    %9 = vector.load %arg4[%c0_5, %c0_6] : memref<1x96xf32, #tpu.memory_space<vmem>>, vector<1x96xf32>
    %10 = vector.broadcast %9 : vector<1x96xf32> to vector<16x96xf32>
    %11 = arith.addf %8, %10 : vector<16x96xf32>
    %12 = vector.extract_strided_slice %11 {offsets = [0, 0], sizes = [16, 8], strides = [1, 1]} : vector<16x96xf32> to vector<16x8xf32>
    %13 = vector.shape_cast %12 : vector<16x8xf32> to vector<2x8x8xf32>
    %14 = vector.extract_strided_slice %11 {offsets = [0, 8], sizes = [16, 8], strides = [1, 1]} : vector<16x96xf32> to vector<16x8xf32>
    %15 = vector.shape_cast %14 : vector<16x8xf32> to vector<2x8x8xf32>
    %16 = vector.extract_strided_slice %11 {offsets = [0, 16], sizes = [16, 8], strides = [1, 1]} : vector<16x96xf32> to vector<16x8xf32>
    %17 = vector.shape_cast %16 : vector<16x8xf32> to vector<2x8x8xf32>
    %18 = vector.extract_strided_slice %11 {offsets = [0, 24], sizes = [16, 8], strides = [1, 1]} : vector<16x96xf32> to vector<16x8xf32>
    %19 = vector.shape_cast %18 : vector<16x8xf32> to vector<2x8x8xf32>
    %20 = tpu.concatenate %13, %15, %17, %19 in 0 : vector<2x8x8xf32>, vector<2x8x8xf32>, vector<2x8x8xf32>, vector<2x8x8xf32> -> vector<8x8x8xf32>
    %21 = vector.extract_strided_slice %11 {offsets = [0, 32], sizes = [16, 8], strides = [1, 1]} : vector<16x96xf32> to vector<16x8xf32>
    %22 = vector.shape_cast %21 : vector<16x8xf32> to vector<2x8x8xf32>
    %23 = vector.extract_strided_slice %11 {offsets = [0, 40], sizes = [16, 8], strides = [1, 1]} : vector<16x96xf32> to vector<16x8xf32>
    %24 = vector.shape_cast %23 : vector<16x8xf32> to vector<2x8x8xf32>
    %25 = vector.extract_strided_slice %11 {offsets = [0, 48], sizes = [16, 8], strides = [1, 1]} : vector<16x96xf32> to vector<16x8xf32>
    %26 = vector.shape_cast %25 : vector<16x8xf32> to vector<2x8x8xf32>
    %27 = vector.extract_strided_slice %11 {offsets = [0, 56], sizes = [16, 8], strides = [1, 1]} : vector<16x96xf32> to vector<16x8xf32>
    %28 = vector.shape_cast %27 : vector<16x8xf32> to vector<2x8x8xf32>
    %29 = tpu.concatenate %22, %24, %26, %28 in 0 : vector<2x8x8xf32>, vector<2x8x8xf32>, vector<2x8x8xf32>, vector<2x8x8xf32> -> vector<8x8x8xf32>
    %30 = vector.extract_strided_slice %11 {offsets = [0, 64], sizes = [16, 8], strides = [1, 1]} : vector<16x96xf32> to vector<16x8xf32>
    %31 = vector.shape_cast %30 : vector<16x8xf32> to vector<2x8x8xf32>
    %32 = vector.extract_strided_slice %11 {offsets = [0, 72], sizes = [16, 8], strides = [1, 1]} : vector<16x96xf32> to vector<16x8xf32>
    %33 = vector.shape_cast %32 : vector<16x8xf32> to vector<2x8x8xf32>
    %34 = vector.extract_strided_slice %11 {offsets = [0, 80], sizes = [16, 8], strides = [1, 1]} : vector<16x96xf32> to vector<16x8xf32>
    %35 = vector.shape_cast %34 : vector<16x8xf32> to vector<2x8x8xf32>
    %36 = vector.extract_strided_slice %11 {offsets = [0, 88], sizes = [16, 8], strides = [1, 1]} : vector<16x96xf32> to vector<16x8xf32>
    %37 = vector.shape_cast %36 : vector<16x8xf32> to vector<2x8x8xf32>
    %38 = tpu.concatenate %31, %33, %35, %37 in 0 : vector<2x8x8xf32>, vector<2x8x8xf32>, vector<2x8x8xf32>, vector<2x8x8xf32> -> vector<8x8x8xf32>
    "tpu.trace_start"() <{level = 10 : i32, message = "gqd,gkd->gqk"}> : () -> ()
    %cst_7 = arith.constant dense<0.000000e+00> : vector<8x8x8xf32>
    %39 = tpu.matmul %20, %29, %cst_7 {dimension_numbers = #tpu.dot_dimension_numbers<[2], [2], [1], [1], [0, 0, 0, 1, 1, 1], [0], [0]>} : vector<8x8x8xf32>, vector<8x8x8xf32>, vector<8x8x8xf32> -> vector<8x8x8xf32>
    "tpu.trace_stop"() : () -> ()
    %40 = vector.shape_cast %39 : vector<8x8x8xf32> to vector<4x2x8x8xf32>
    %c0_8 = arith.constant 0 : index
    %c0_9 = arith.constant 0 : index
    %c0_10 = arith.constant 0 : index
    %41 = vector.load %arg2[%c0_8, %c0_9, %c0_10] : memref<2x8x8xf32, #tpu.memory_space<vmem>>, vector<2x8x8xf32>
    %42 = vector.shape_cast %41 : vector<2x8x8xf32> to vector<1x2x8x8xf32>
    %cst_11 = arith.constant 0.000000e+00 : f32
    %43 = vector.broadcast %cst_11 : f32 to vector<1x2x8x8xf32>
    %44 = arith.cmpf ogt, %42, %43 : vector<1x2x8x8xf32>
    %cst_12 = arith.constant -1.000000e+09 : f32
    %45 = vector.shape_cast %44 : vector<1x2x8x8xi1> to vector<1x2x8x8xi1>
    %46 = vector.broadcast %45 : vector<1x2x8x8xi1> to vector<4x2x8x8xi1>
    %47 = vector.broadcast %cst_12 : f32 to vector<4x2x8x8xf32>
    %48 = arith.select %46, %47, %40 : vector<4x2x8x8xi1>, vector<4x2x8x8xf32>
    %cst_13 = arith.constant dense<0xFF800000> : vector<4x2x8xf32>
    %49 = vector.multi_reduction <maximumf>, %48, %cst_13 [3] : vector<4x2x8x8xf32> to vector<4x2x8xf32>
    %50 = vector.shape_cast %49 : vector<4x2x8xf32> to vector<4x2x8x1xf32>
    %51 = vector.broadcast %50 : vector<4x2x8x1xf32> to vector<4x2x8x8xf32>
    %52 = arith.subf %48, %51 : vector<4x2x8x8xf32>
    %53 = math.exp %52 : vector<4x2x8x8xf32>
    %cst_14 = arith.constant dense<0.000000e+00> : vector<4x2x8xf32>
    %54 = vector.multi_reduction <add>, %53, %cst_14 [3] : vector<4x2x8x8xf32> to vector<4x2x8xf32>
    %55 = vector.shape_cast %54 : vector<4x2x8xf32> to vector<4x2x8x1xf32>
    %56 = tpu.reciprocal %55 {approx = true} : vector<4x2x8x1xf32> -> vector<4x2x8x1xf32>
    %57 = arith.mulf %55, %56 : vector<4x2x8x1xf32>
    %cst_15 = arith.constant 2.000000e+00 : f32
    %58 = vector.broadcast %cst_15 : f32 to vector<4x2x8x1xf32>
    %59 = arith.subf %58, %57 : vector<4x2x8x1xf32>
    %60 = arith.mulf %56, %59 : vector<4x2x8x1xf32>
    %61 = vector.broadcast %60 : vector<4x2x8x1xf32> to vector<4x2x8x8xf32>
    %62 = arith.mulf %53, %61 : vector<4x2x8x8xf32>
    %63 = vector.shape_cast %62 : vector<4x2x8x8xf32> to vector<8x8x8xf32>
    %c0_16 = arith.constant 0 : index
    %c0_17 = arith.constant 0 : index
    %c0_18 = arith.constant 0 : index
    %64 = vector.load %arg10[%c0_16, %c0_17, %c0_18] : memref<8x8x8xf32, #tpu.memory_space<vmem>>, vector<8x8x8xf32>
    tpu.vector_store %arg10[%c0_16, %c0_17, %c0_18], %63 {strides = array<i32>} : memref<8x8x8xf32, #tpu.memory_space<vmem>>, vector<8x8x8xf32>,
    "tpu.trace_start"() <{level = 10 : i32, message = "gqk,gkd->gqd"}> : () -> ()
    %cst_19 = arith.constant dense<0.000000e+00> : vector<8x8x8xf32>
    %65 = tpu.matmul %63, %38, %cst_19 {dimension_numbers = #tpu.dot_dimension_numbers<[2], [1], [1], [2], [0, 0, 0, 1, 1, 2], [0], [0]>} : vector<8x8x8xf32>, vector<8x8x8xf32>, vector<8x8x8xf32> -> vector<8x8x8xf32>
    "tpu.trace_stop"() : () -> ()
    %66 = vector.extract_strided_slice %65 {offsets = [0, 0, 0], sizes = [2, 8, 8], strides = [1, 1, 1]} : vector<8x8x8xf32> to vector<2x8x8xf32>
    %67 = vector.shape_cast %66 : vector<2x8x8xf32> to vector<16x8xf32>
    %68 = vector.extract_strided_slice %65 {offsets = [2, 0, 0], sizes = [2, 8, 8], strides = [1, 1, 1]} : vector<8x8x8xf32> to vector<2x8x8xf32>
    %69 = vector.shape_cast %68 : vector<2x8x8xf32> to vector<16x8xf32>
    %70 = vector.extract_strided_slice %65 {offsets = [4, 0, 0], sizes = [2, 8, 8], strides = [1, 1, 1]} : vector<8x8x8xf32> to vector<2x8x8xf32>
    %71 = vector.shape_cast %70 : vector<2x8x8xf32> to vector<16x8xf32>
    %72 = vector.extract_strided_slice %65 {offsets = [6, 0, 0], sizes = [2, 8, 8], strides = [1, 1, 1]} : vector<8x8x8xf32> to vector<2x8x8xf32>
    %73 = vector.shape_cast %72 : vector<2x8x8xf32> to vector<16x8xf32>
    %74 = tpu.concatenate %67, %69, %71, %73 in 1 : vector<16x8xf32>, vector<16x8xf32>, vector<16x8xf32>, vector<16x8xf32> -> vector<16x32xf32>
    %c0_20 = arith.constant 0 : index
    %c0_21 = arith.constant 0 : index
    %75 = vector.load %arg5[%c0_20, %c0_21] : memref<32x32xf32, #tpu.memory_space<vmem>>, vector<32x32xf32>
    %cst_22 = arith.constant dense<0.000000e+00> : vector<16x32xf32>
    %76 = tpu.matmul %74, %75, %cst_22 {dimension_numbers = #tpu.dot_dimension_numbers<[1], [0], [0], [1], [0, 0, 1, 1], [], []>} : vector<16x32xf32>, vector<32x32xf32>, vector<16x32xf32> -> vector<16x32xf32>
    %77 = vector.broadcast %2 : vector<1x32xf32> to vector<16x32xf32>
    %78 = arith.addf %76, %77 : vector<16x32xf32>
    %79 = arith.addf %78, %0 : vector<16x32xf32>
    %cst_23 = arith.constant dense<0.000000e+00> : vector<16xf32>
    %80 = vector.multi_reduction <add>, %79, %cst_23 [1] : vector<16x32xf32> to vector<16xf32>
    %81 = vector.shape_cast %80 : vector<16xf32> to vector<16x1xf32>
    %cst_24 = arith.constant 3.200000e+01 : f32
    %82 = vector.broadcast %cst_24 : f32 to vector<16x1xf32>
    %83 = arith.divf %81, %82 : vector<16x1xf32>
    %84 = vector.broadcast %83 : vector<16x1xf32> to vector<16x32xf32>
    %85 = arith.subf %79, %84 : vector<16x32xf32>
    %86 = vector.broadcast %83 : vector<16x1xf32> to vector<16x32xf32>
    %87 = arith.subf %79, %86 : vector<16x32xf32>
    %88 = arith.mulf %85, %87 : vector<16x32xf32>
    %cst_25 = arith.constant dense<0.000000e+00> : vector<16xf32>
    %89 = vector.multi_reduction <add>, %88, %cst_25 [1] : vector<16x32xf32> to vector<16xf32>
    %90 = vector.shape_cast %89 : vector<16xf32> to vector<16x1xf32>
    %cst_26 = arith.constant 3.200000e+01 : f32
    %91 = vector.broadcast %cst_26 : f32 to vector<16x1xf32>
    %92 = arith.divf %90, %91 : vector<16x1xf32>
    %93 = vector.broadcast %83 : vector<16x1xf32> to vector<16x32xf32>
    %94 = arith.subf %79, %93 : vector<16x32xf32>
    %cst_27 = arith.constant 9.99999974E-6 : f32
    %95 = vector.broadcast %cst_27 : f32 to vector<16x1xf32>
    %96 = arith.addf %92, %95 : vector<16x1xf32>
    %97 = math.rsqrt %96 : vector<16x1xf32>
    %98 = vector.broadcast %97 : vector<16x1xf32> to vector<16x32xf32>
    %99 = arith.mulf %94, %98 : vector<16x32xf32>
    %100 = vector.broadcast %3 : vector<1x32xf32> to vector<16x32xf32>
    %101 = arith.mulf %99, %100 : vector<16x32xf32>
    %102 = vector.broadcast %4 : vector<1x32xf32> to vector<16x32xf32>
    %103 = arith.addf %101, %102 : vector<16x32xf32>
    %c0_28 = arith.constant 0 : index
    %c0_29 = arith.constant 0 : index
    %104 = vector.load %arg6[%c0_28, %c0_29] : memref<32x64xf32, #tpu.memory_space<vmem>>, vector<32x64xf32>
    %cst_30 = arith.constant dense<0.000000e+00> : vector<16x64xf32>
    %105 = tpu.matmul %103, %104, %cst_30 {dimension_numbers = #tpu.dot_dimension_numbers<[1], [0], [0], [1], [0, 0, 1, 1], [], []>} : vector<16x32xf32>, vector<32x64xf32>, vector<16x64xf32> -> vector<16x64xf32>
    %106 = vector.broadcast %6 : vector<1x64xf32> to vector<16x64xf32>
    %107 = arith.addf %105, %106 : vector<16x64xf32>
    %cst_31 = arith.constant 5.000000e-01 : f32
    %108 = vector.broadcast %cst_31 : f32 to vector<16x64xf32>
    %109 = arith.mulf %107, %108 : vector<16x64xf32>
    %cst_32 = arith.constant 0.707106769 : f32
    %110 = vector.broadcast %cst_32 : f32 to vector<16x64xf32>
    %111 = arith.mulf %107, %110 : vector<16x64xf32>
    %112 = math.erf %111 : vector<16x64xf32>
    %cst_33 = arith.constant 1.000000e+00 : f32
    %113 = vector.broadcast %cst_33 : f32 to vector<16x64xf32>
    %114 = arith.addf %113, %112 : vector<16x64xf32>
    %115 = arith.mulf %109, %114 : vector<16x64xf32>
    %c0_34 = arith.constant 0 : index
    %c0_35 = arith.constant 0 : index
    %116 = vector.load %arg7[%c0_34, %c0_35] : memref<64x32xf32, #tpu.memory_space<vmem>>, vector<64x32xf32>
    %cst_36 = arith.constant dense<0.000000e+00> : vector<16x32xf32>
    %117 = tpu.matmul %115, %116, %cst_36 {dimension_numbers = #tpu.dot_dimension_numbers<[1], [0], [0], [1], [0, 0, 1, 1], [], []>} : vector<16x64xf32>, vector<64x32xf32>, vector<16x32xf32> -> vector<16x32xf32>
    %118 = vector.broadcast %5 : vector<1x32xf32> to vector<16x32xf32>
    %119 = arith.addf %117, %118 : vector<16x32xf32>
    %c0_37 = arith.constant 0 : index
    %c0_38 = arith.constant 0 : index
    %120 = vector.load %arg9[%c0_37, %c0_38] : memref<16x32xf32, #tpu.memory_space<vmem>>, vector<16x32xf32>
    tpu.vector_store %arg9[%c0_37, %c0_38], %119 {strides = array<i32>} : memref<16x32xf32, #tpu.memory_space<vmem>>, vector<16x32xf32>,
    return
  }
  func.func @transform_0(%arg0: i32) -> (i32, i32) {
    %c0_i32 = arith.constant 0 : i32
    %c0_i32_0 = arith.constant 0 : i32
    %c0_i32_1 = arith.constant 0 : i32
    return %c0_i32, %c0_i32_0 : i32, i32
  }
  func.func @transform_1(%arg0: i32) -> (i32, i32, i32) {
    %c0_i32 = arith.constant 0 : i32
    %c0_i32_0 = arith.constant 0 : i32
    %c0_i32_1 = arith.constant 0 : i32
    %c0_i32_2 = arith.constant 0 : i32
    return %c0_i32, %c0_i32_0, %c0_i32_1 : i32, i32, i32
  }
  func.func @transform_2(%arg0: i32) -> (i32, i32) {
    %c0_i32 = arith.constant 0 : i32
    %c0_i32_0 = arith.constant 0 : i32
    %c0_i32_1 = arith.constant 0 : i32
    return %c0_i32, %c0_i32_0 : i32, i32
  }
  func.func @transform_3(%arg0: i32) -> (i32, i32) {
    %c0_i32 = arith.constant 0 : i32
    %c0_i32_0 = arith.constant 0 : i32
    %c0_i32_1 = arith.constant 0 : i32
    return %c0_i32, %c0_i32_0 : i32, i32
  }
  func.func @transform_4(%arg0: i32) -> (i32, i32) {
    %c0_i32 = arith.constant 0 : i32
    %c0_i32_0 = arith.constant 0 : i32
    %c0_i32_1 = arith.constant 0 : i32
    return %c0_i32, %c0_i32_0 : i32, i32
  }
  func.func @transform_5(%arg0: i32) -> (i32, i32) {
    %c0_i32 = arith.constant 0 : i32
    %c0_i32_0 = arith.constant 0 : i32
    %c0_i32_1 = arith.constant 0 : i32
    return %c0_i32, %c0_i32_0 : i32, i32
  }
  func.func @transform_6(%arg0: i32) -> (i32, i32) {
    %c0_i32 = arith.constant 0 : i32
    %c0_i32_0 = arith.constant 0 : i32
    %c0_i32_1 = arith.constant 0 : i32
    return %c0_i32, %c0_i32_0 : i32, i32
  }
  func.func @transform_7(%arg0: i32) -> (i32, i32) {
    %c0_i32 = arith.constant 0 : i32
    %c0_i32_0 = arith.constant 0 : i32
    %c0_i32_1 = arith.constant 0 : i32
    return %c0_i32, %c0_i32_0 : i32, i32
  }
  func.func @transform_8(%arg0: i32) -> (i32, i32) {
    %c0_i32 = arith.constant 0 : i32
    %c0_i32_0 = arith.constant 0 : i32
    %c0_i32_1 = arith.constant 0 : i32
    return %c0_i32, %c0_i32_0 : i32, i32
  }
  func.func @transform_9(%arg0: i32) -> (i32, i32, i32) {
    %c0_i32 = arith.constant 0 : i32
    %c0_i32_0 = arith.constant 0 : i32
    %c0_i32_1 = arith.constant 0 : i32
    %c0_i32_2 = arith.constant 0 : i32
    return %c0_i32, %c0_i32_0, %c0_i32_1 : i32, i32, i32
  }
}

</mosaic_0001>

<llo_original>
// kernel: encoder_layer.1
$region0: #{encoder_layer.1}
  #allocation0 [shape = 'u32[]', space=smem, size = 0x4, offset = 0x4, fixed_abs, tag = 'smem constant byte address 0x4 - core index']
  #allocation1 [shape = 'u32[144,128]{1,0:T(1,128)}', space=vmem, size = 0x12000, scoped, tag = 'internal scratch']
  %s0 = inlined_call_operand.hbm [shape: f32[16,32], index: 0, kind: input, shape index: {}]
  %s1 = inlined_call_operand.hbm [shape: f32[2,8,8], index: 1, kind: input, shape index: {}]
  %s2 = inlined_call_operand.vmem [shape: f32[32,96], index: 2, kind: input, shape index: {}]
  %s3 = inlined_call_operand.vmem [shape: f32[1,96], index: 3, kind: input, shape index: {}]
  %s4 = inlined_call_operand.vmem [shape: f32[32,32], index: 4, kind: input, shape index: {}]
  %s5 = inlined_call_operand.vmem [shape: f32[32,64], index: 5, kind: input, shape index: {}]
  %s6 = inlined_call_operand.vmem [shape: f32[64,32], index: 6, kind: input, shape index: {}]
  %s7 = inlined_call_operand.vmem [shape: f32[8,64], index: 7, kind: input, shape index: {}]
  %s8 = inlined_call_operand.hbm [shape: f32[16,32], index: 8, kind: output, shape index: {0}]
  %s9 = inlined_call_operand.vmem [shape: f32[8,8,8], index: 9, kind: output, shape index: {1}]
  %10 = xla_tuple %s8, %s9
  %s11 = sld [smem:[#allocation0]]
  $region58: #{encoder_layer.1} parent=0
    _
  %s13 = ssub.s32 1, %s11
  %s14 = scalar_select 0, %s13, %s11
  $region1: #{encoder_layer.1} parent=0
    #allocation2 [shape = 'u8[8192]{0}', space=vmem, size = 0x2000, scoped, tag = 'input window, operand 0, single buffered']
    #allocation3 [shape = 's32[1]{0}', space=sflag, size = 0x4, scoped, tag = 'scoped memory for encoder_layer.1']
    #allocation4 [shape = 's32[1]{0}', space=sflag, size = 0x4, scoped, tag = 'scoped memory for encoder_layer.1']
    #allocation5 [shape = 'u8[8192]{0}', space=vmem, size = 0x2000, scoped, tag = 'input window, operand 1, single buffered']
    #allocation6 [shape = 's32[1]{0}', space=sflag, size = 0x4, scoped, tag = 'scoped memory for encoder_layer.1']
    #allocation7 [shape = 'u8[8192]{0}', space=vmem, size = 0x2000, scoped, tag = 'output window, operand 0, single buffered']
    %15 = vsyncpa [#allocation3], 0
    %16 = vsyncpa [#allocation6], 0
    %17 = vsyncpa [#allocation4], 0
    // Predicated region
    $region2: #{encoder_layer.1} parent=1 // pred_check
      _
    $region3: #{encoder_layer.1} parent=1 // pred_check_branch
      %19 = sbr.rel (0) target = $region5
    $region4: #{encoder_layer.1} parent=1 // pred_region
      %s21 = ssub.s32 256, 256
      %22 = vsyncadd [#allocation3], %s21
      %s23 = sshll.u32 [#allocation2], 4
      %s24 = int_to_ptr.vmem [resolvable:$true] %s23
      %29 = dma.hbm_to_vmem [thread:$0]  %s0, 256, %s24, [#allocation3], 128, 128, 8
    $region5: #{encoder_layer.1} parent=1 // pred_fallthru
      _
    // Predicated region
    $region6: #{encoder_layer.1} parent=1 // pred_check
      _
    $region7: #{encoder_layer.1} parent=1 // pred_check_branch
      %31 = sbr.rel (0) target = $region9
    $region8: #{encoder_layer.1} parent=1 // pred_region
      %s33 = ssub.s32 256, 256
      %34 = vsyncadd [#allocation6], %s33
      %s35 = sshll.u32 [#allocation5], 4
      %s36 = int_to_ptr.vmem [resolvable:$true] %s35
      %41 = dma.hbm_to_vmem [thread:$0]  %s1, 256, %s36, [#allocation6], 128, 128, 8
    $region9: #{encoder_layer.1} parent=1 // pred_fallthru
      _
    // Predicated region
    $region10: #{encoder_layer.1} parent=1 // pred_check
      _
    $region11: #{encoder_layer.1} parent=1 // pred_check_branch
      %43 = sbr.rel (0) target = $region13
    $region12: #{encoder_layer.1} parent=1 // pred_region
      _
    $region13: #{encoder_layer.1} parent=1 // pred_fallthru
      _
    // Predicated region
    $region14: #{encoder_layer.1} parent=1 // pred_check
      _
    $region15: #{encoder_layer.1} parent=1 // pred_check_branch
      %45 = sbr.rel (0) target = $region17
    $region16: #{encoder_layer.1} parent=1 // pred_region
      _
    $region17: #{encoder_layer.1} parent=1 // pred_fallthru
      _
    // Predicated region
    $region18: #{encoder_layer.1} parent=1 // pred_check
      _
    $region19: #{encoder_layer.1} parent=1 // pred_check_branch
      %47 = sbr.rel (0) target = $region21
    $region20: #{encoder_layer.1} parent=1 // pred_region
      _
    $region21: #{encoder_layer.1} parent=1 // pred_fallthru
      _
    // Predicated region
    $region22: #{encoder_layer.1} parent=1 // pred_check
      _
    $region23: #{encoder_layer.1} parent=1 // pred_check_branch
      %49 = sbr.rel (0) target = $region25
    $region24: #{encoder_layer.1} parent=1 // pred_region
      _
    $region25: #{encoder_layer.1} parent=1 // pred_fallthru
      _
    // Predicated region
    $region26: #{encoder_layer.1} parent=1 // pred_check
      _
    $region27: #{encoder_layer.1} parent=1 // pred_check_branch
      %51 = sbr.rel (0) target = $region29
    $region28: #{encoder_layer.1} parent=1 // pred_region
      _
    $region29: #{encoder_layer.1} parent=1 // pred_fallthru
      _
    // Predicated region
    $region30: #{encoder_layer.1} parent=1 // pred_check
      _
    $region31: #{encoder_layer.1} parent=1 // pred_check_branch
      %53 = sbr.rel (0) target = $region33
    $region32: #{encoder_layer.1} parent=1 // pred_region
      _
    $region33: #{encoder_layer.1} parent=1 // pred_fallthru
      _
    // Predicated region
    $region34: #{encoder_layer.1} parent=1 // pred_check
      _
    $region35: #{encoder_layer.1} parent=1 // pred_check_branch
      %55 = sbr.rel (0) target = $region37
    $region36: #{encoder_layer.1} parent=1 // pred_region
      %56 = dma.done [#allocation3], 256
    $region37: #{encoder_layer.1} parent=1 // pred_fallthru
      _
    // Predicated region
    $region38: #{encoder_layer.1} parent=1 // pred_check
      _
    $region39: #{encoder_layer.1} parent=1 // pred_check_branch
      %58 = sbr.rel (0) target = $region41
    $region40: #{encoder_layer.1} parent=1 // pred_region
      %59 = dma.done [#allocation6], 256
    $region41: #{encoder_layer.1} parent=1 // pred_fallthru
      _
    %v60 = vld [vmem:[#allocation2] sm:$0xff]
    %v61 = vld [vmem:[#allocation2 + $0x8] sm:$0xff]
    %v62 = vld [vmem:[%s7] sm:$0xff]
    %v63 = vld [vmem:[%s2] sm:$0xff]
    %v64 = vld [vmem:[%s2 + $0x8] sm:$0xff]
    %v65 = vld [vmem:[%s2 + $0x10] sm:$0xff]
    %v66 = vld [vmem:[%s2 + $0x18] sm:$0xff]
    %v67 = vld [vmem:[%s3] sm:$0x1]
    %v69 = vlaneseq
    %v70 = vshrl.u32 %v69, 7
    %v71 = vsub.s32 0, %v70
    %v72 = vrot.slane %v67, %v71
    %vm74 = vcmask 261120
    %v76 = vsel %vm74, %v60, 0
    %v79 = vsel %vm74, %v61, 0
    %81 = vmatprep.subr.mxu0 0.0
    %82 = vmatpush1.msra.mxu0 %v63
    %83 = vmatprep.subr.mxu0 0.0
    %84 = vmatpush1.msra.mxu0 %v64
    %85 = vmatprep.subr.mxu0 0.0
    %86 = vmatpush1.msra.mxu0 %v65
    %87 = vmatprep.subr.mxu0 0.0
    %88 = vmatpush1.msra.mxu0 %v66
    %89 = vmatprep.subr.mxu0 0.0
    %90 = vmatpush1.msra.mxu0 0.0
    %91 = vmatprep.subr.mxu0 0.0
    %92 = vmatpush1.msra.mxu0 0.0
    %93 = vmatprep.subr.mxu0 0.0
    %94 = vmatpush1.msra.mxu0 0.0
    %95 = vmatprep.subr.mxu0 0.0
    %96 = vmatpush1.msra.mxu0 0.0
    %97 = vmatprep.subr.mxu0 0.0
    %98 = vmatpush1.msra.mxu0 0.0
    %99 = vmatprep.subr.mxu0 0.0
    %100 = vmatpush1.msra.mxu0 0.0
    %101 = vmatprep.subr.mxu0 0.0
    %102 = vmatpush1.msra.mxu0 0.0
    %103 = vmatprep.subr.mxu0 0.0
    %104 = vmatpush1.msra.mxu0 0.0
    %105 = vmatprep.subr.mxu0 0.0
    %106 = vmatpush1.msra.mxu0 0.0
    %107 = vmatprep.subr.mxu0 0.0
    %108 = vmatpush1.msra.mxu0 0.0
    %109 = vmatprep.subr.mxu0 0.0
    %110 = vmatpush1.msra.mxu0 0.0
    %111 = vmatprep.subr.mxu0 0.0
    %112 = vmatpush1.msra.mxu0 0.0
    %113 = vmatprep.subr.mxu0 0.0
    %114 = vmatpush1.msra.mxu0 0.0
    %115 = vmatprep.subr.mxu0 0.0
    %116 = vmatpush1.msra.mxu0 0.0
    %117 = vmatprep.subr.mxu0 0.0
    %118 = vmatpush1.msra.mxu0 0.0
    %119 = vmatprep.subr.mxu0 0.0
    %120 = vmatpush1.msra.mxu0 0.0
    %121 = vmatprep.subr.mxu0 0.0
    %122 = vmatpush1.msra.mxu0 0.0
    %123 = vmatprep.subr.mxu0 0.0
    %124 = vmatpush1.msra.mxu0 0.0
    %125 = vmatprep.subr.mxu0 0.0
    %126 = vmatpush1.msra.mxu0 0.0
    %127 = vmatprep.subr.mxu0 0.0
    %128 = vmatpush1.msra.mxu0 0.0
    %129 = vmatprep.subr.mxu0 0.0
    %130 = vmatpush1.msra.mxu0 0.0
    %131 = vmatprep.subr.mxu0 0.0
    %132 = vmatpush1.msra.mxu0 0.0
    %133 = vmatprep.subr.mxu0 0.0
    %134 = vmatpush1.msra.mxu0 0.0
    %135 = vmatprep.subr.mxu0 0.0
    %136 = vmatpush1.msra.mxu0 0.0
    %137 = vmatprep.subr.mxu0 0.0
    %138 = vmatpush1.msra.mxu0 0.0
    %139 = vmatprep.subr.mxu0 0.0
    %140 = vmatpush1.msra.mxu0 0.0
    %141 = vmatprep.subr.mxu0 0.0
    %142 = vmatpush1.msra.mxu0 0.0
    %143 = vmatprep.subr.mxu0 0.0
    %144 = vmatpush1.msra.mxu0 0.0
    %145 = vmatprep.mubr.f32.mxu0 0.0
    %146 = vmatmul.mubr.f32.gmra.mrb[0].mxu0 %v76
    %v147 = vpop.f32.mrb[0].mxu0
    %v148 = vadd.f32 %v72, %v147
    %v149 = vpop.f32.mrb[0].mxu0
    %150 = vmatprep.mubr.f32.mxu0 0.0
    %151 = vmatmul.mubr.f32.gmra.mrb[0].mxu0 %v79
    %v152 = vpop.f32.mrb[0].mxu0
    %v153 = vadd.f32 %v72, %v152
    %v154 = vpop.f32.mrb[0].mxu0
    %155 = vdwg.mxu0
    %158 = vrot.lane.b32.xlu0 %v148, 120
    %v159 = vpop.permute.xlu0 %158
    %160 = vrot.lane.b32.xlu0 %v153, 120
    %v161 = vpop.permute.xlu0 %160
    %162 = vrot.lane.b32.xlu0 %v148, 112
    %v163 = vpop.permute.xlu0 %162
    %164 = vrot.lane.b32.xlu0 %v153, 112
    %v165 = vpop.permute.xlu0 %164
    %166 = vrot.lane.b32.xlu0 %v148, 104
    %v167 = vpop.permute.xlu0 %166
    %168 = vrot.lane.b32.xlu0 %v153, 104
    %v169 = vpop.permute.xlu0 %168
    %170 = vrot.lane.b32.xlu0 %v148, 96
    %v171 = vpop.permute.xlu0 %170
    %vm172 = vcmask 64512
    %v173 = vsel %vm172, %v148, 0
    %v175 = vsel %vm172, %v171, 0
    %177 = vmatprep.subr.mxu0 0.0
    %178 = vmatpush1.xpose.msra.mxu0 %v175
    %179 = vmatprep.subr.mxu0 0.0
    %180 = vmatpush1.xpose.msra.mxu0 0.0
    %181 = vmatprep.subr.mxu0 0.0
    %182 = vmatpush1.xpose.msra.mxu0 0.0
    %183 = vmatprep.subr.mxu0 0.0
    %184 = vmatpush1.xpose.msra.mxu0 0.0
    %185 = vmatprep.subr.mxu0 0.0
    %186 = vmatpush1.xpose.msra.mxu0 0.0
    %187 = vmatprep.subr.mxu0 0.0
    %188 = vmatpush1.xpose.msra.mxu0 0.0
    %189 = vmatprep.subr.mxu0 0.0
    %190 = vmatpush1.xpose.msra.mxu0 0.0
    %191 = vmatprep.subr.mxu0 0.0
    %192 = vmatpush1.xpose.msra.mxu0 0.0
    %193 = vmatprep.subr.mxu0 0.0
    %194 = vmatpush1.xpose.msra.mxu0 0.0
    %195 = vmatprep.subr.mxu0 0.0
    %196 = vmatpush1.xpose.msra.mxu0 0.0
    %197 = vmatprep.subr.mxu0 0.0
    %198 = vmatpush1.xpose.msra.mxu0 0.0
    %199 = vmatprep.subr.mxu0 0.0
    %200 = vmatpush1.xpose.msra.mxu0 0.0
    %201 = vmatprep.subr.mxu0 0.0
    %202 = vmatpush1.xpose.msra.mxu0 0.0
    %203 = vmatprep.subr.mxu0 0.0
    %204 = vmatpush1.xpose.msra.mxu0 0.0
    %205 = vmatprep.subr.mxu0 0.0
    %206 = vmatpush1.xpose.msra.mxu0 0.0
    %207 = vmatprep.subr.mxu0 0.0
    %208 = vmatpush1.xpose.msra.mxu0 0.0
    %209 = vmatprep.subr.mxu0 0.0
    %210 = vmatpush1.xpose.msra.mxu0 0.0
    %211 = vmatprep.subr.mxu0 0.0
    %212 = vmatpush1.xpose.msra.mxu0 0.0
    %213 = vmatprep.subr.mxu0 0.0
    %214 = vmatpush1.xpose.msra.mxu0 0.0
    %215 = vmatprep.subr.mxu0 0.0
    %216 = vmatpush1.xpose.msra.mxu0 0.0
    %217 = vmatprep.subr.mxu0 0.0
    %218 = vmatpush1.xpose.msra.mxu0 0.0
    %219 = vmatprep.subr.mxu0 0.0
    %220 = vmatpush1.xpose.msra.mxu0 0.0
    %221 = vmatprep.subr.mxu0 0.0
    %222 = vmatpush1.xpose.msra.mxu0 0.0
    %223 = vmatprep.subr.mxu0 0.0
    %224 = vmatpush1.xpose.msra.mxu0 0.0
    %225 = vmatprep.subr.mxu0 0.0
    %226 = vmatpush1.xpose.msra.mxu0 0.0
    %227 = vmatprep.subr.mxu0 0.0
    %228 = vmatpush1.xpose.msra.mxu0 0.0
    %229 = vmatprep.subr.mxu0 0.0
    %230 = vmatpush1.xpose.msra.mxu0 0.0
    %231 = vmatprep.subr.mxu0 0.0
    %232 = vmatpush1.xpose.msra.mxu0 0.0
    %233 = vmatprep.subr.mxu0 0.0
    %234 = vmatpush1.xpose.msra.mxu0 0.0
    %235 = vmatprep.subr.mxu0 0.0
    %236 = vmatpush1.xpose.msra.mxu0 0.0
    %237 = vmatprep.subr.mxu0 0.0
    %238 = vmatpush1.xpose.msra.mxu0 0.0
    %239 = vmatprep.subr.mxu0 0.0
    %240 = vmatpush1.xpose.msra.mxu0 0.0
    %241 = vmatprep.mubr.f32.mxu0 0.0
    %242 = vmatmul.mubr.f32.gmra.mrb[0].mxu0 %v173
    %v243 = vpop.f32.mrb[0].mxu0
    %v244 = vadd.f32 0.0, %v243
    %v245 = vpop.f32.mrb[0].mxu0
    %246 = vdwg.mxu0
    %247 = vrot.lane.b32.xlu0 %v153, 96
    %v248 = vpop.permute.xlu0 %247
    %v249 = vsel %vm172, %v153, 0
    %v251 = vsel %vm172, %v248, 0
    %253 = vmatprep.subr.mxu0 0.0
    %254 = vmatpush1.xpose.msra.mxu0 %v251
    %255 = vmatprep.subr.mxu0 0.0
    %256 = vmatpush1.xpose.msra.mxu0 0.0
    %257 = vmatprep.subr.mxu0 0.0
    %258 = vmatpush1.xpose.msra.mxu0 0.0
    %259 = vmatprep.subr.mxu0 0.0
    %260 = vmatpush1.xpose.msra.mxu0 0.0
    %261 = vmatprep.subr.mxu0 0.0
    %262 = vmatpush1.xpose.msra.mxu0 0.0
    %263 = vmatprep.subr.mxu0 0.0
    %264 = vmatpush1.xpose.msra.mxu0 0.0
    %265 = vmatprep.subr.mxu0 0.0
    %266 = vmatpush1.xpose.msra.mxu0 0.0
    %267 = vmatprep.subr.mxu0 0.0
    %268 = vmatpush1.xpose.msra.mxu0 0.0
    %269 = vmatprep.subr.mxu0 0.0
    %270 = vmatpush1.xpose.msra.mxu0 0.0
    %271 = vmatprep.subr.mxu0 0.0
    %272 = vmatpush1.xpose.msra.mxu0 0.0
    %273 = vmatprep.subr.mxu0 0.0
    %274 = vmatpush1.xpose.msra.mxu0 0.0
    %275 = vmatprep.subr.mxu0 0.0
    %276 = vmatpush1.xpose.msra.mxu0 0.0
    %277 = vmatprep.subr.mxu0 0.0
    %278 = vmatpush1.xpose.msra.mxu0 0.0
    %279 = vmatprep.subr.mxu0 0.0
    %280 = vmatpush1.xpose.msra.mxu0 0.0
    %281 = vmatprep.subr.mxu0 0.0
    %282 = vmatpush1.xpose.msra.mxu0 0.0
    %283 = vmatprep.subr.mxu0 0.0
    %284 = vmatpush1.xpose.msra.mxu0 0.0
    %285 = vmatprep.subr.mxu0 0.0
    %286 = vmatpush1.xpose.msra.mxu0 0.0
    %287 = vmatprep.subr.mxu0 0.0
    %288 = vmatpush1.xpose.msra.mxu0 0.0
    %289 = vmatprep.subr.mxu0 0.0
    %290 = vmatpush1.xpose.msra.mxu0 0.0
    %291 = vmatprep.subr.mxu0 0.0
    %292 = vmatpush1.xpose.msra.mxu0 0.0
    %293 = vmatprep.subr.mxu0 0.0
    %294 = vmatpush1.xpose.msra.mxu0 0.0
    %295 = vmatprep.subr.mxu0 0.0
    %296 = vmatpush1.xpose.msra.mxu0 0.0
    %297 = vmatprep.subr.mxu0 0.0
    %298 = vmatpush1.xpose.msra.mxu0 0.0
    %299 = vmatprep.subr.mxu0 0.0
    %300 = vmatpush1.xpose.msra.mxu0 0.0
    %301 = vmatprep.subr.mxu0 0.0
    %302 = vmatpush1.xpose.msra.mxu0 0.0
    %303 = vmatprep.subr.mxu0 0.0
    %304 = vmatpush1.xpose.msra.mxu0 0.0
    %305 = vmatprep.subr.mxu0 0.0
    %306 = vmatpush1.xpose.msra.mxu0 0.0
    %307 = vmatprep.subr.mxu0 0.0
    %308 = vmatpush1.xpose.msra.mxu0 0.0
    %309 = vmatprep.subr.mxu0 0.0
    %310 = vmatpush1.xpose.msra.mxu0 0.0
    %311 = vmatprep.subr.mxu0 0.0
    %312 = vmatpush1.xpose.msra.mxu0 0.0
    %313 = vmatprep.subr.mxu0 0.0
    %314 = vmatpush1.xpose.msra.mxu0 0.0
    %315 = vmatprep.subr.mxu0 0.0
    %316 = vmatpush1.xpose.msra.mxu0 0.0
    %317 = vmatprep.mubr.f32.mxu0 0.0
    %318 = vmatmul.mubr.f32.gmra.mrb[0].mxu0 %v249
    %v319 = vpop.f32.mrb[0].mxu0
    %v320 = vadd.f32 0.0, %v319
    %v321 = vpop.f32.mrb[0].mxu0
    %322 = vdwg.mxu0
    %323 = vrot.lane.b32.xlu0 %v159, 96
    %v324 = vpop.permute.xlu0 %323
    %v325 = vsel %vm172, %v159, 0
    %v327 = vsel %vm172, %v324, 0
    %329 = vmatprep.subr.mxu0 0.0
    %330 = vmatpush1.xpose.msra.mxu0 %v327
    %331 = vmatprep.subr.mxu0 0.0
    %332 = vmatpush1.xpose.msra.mxu0 0.0
    %333 = vmatprep.subr.mxu0 0.0
    %334 = vmatpush1.xpose.msra.mxu0 0.0
    %335 = vmatprep.subr.mxu0 0.0
    %336 = vmatpush1.xpose.msra.mxu0 0.0
    %337 = vmatprep.subr.mxu0 0.0
    %338 = vmatpush1.xpose.msra.mxu0 0.0
    %339 = vmatprep.subr.mxu0 0.0
    %340 = vmatpush1.xpose.msra.mxu0 0.0
    %341 = vmatprep.subr.mxu0 0.0
    %342 = vmatpush1.xpose.msra.mxu0 0.0
    %343 = vmatprep.subr.mxu0 0.0
    %344 = vmatpush1.xpose.msra.mxu0 0.0
    %345 = vmatprep.subr.mxu0 0.0
    %346 = vmatpush1.xpose.msra.mxu0 0.0
    %347 = vmatprep.subr.mxu0 0.0
    %348 = vmatpush1.xpose.msra.mxu0 0.0
    %349 = vmatprep.subr.mxu0 0.0
    %350 = vmatpush1.xpose.msra.mxu0 0.0
    %351 = vmatprep.subr.mxu0 0.0
    %352 = vmatpush1.xpose.msra.mxu0 0.0
    %353 = vmatprep.subr.mxu0 0.0
    %354 = vmatpush1.xpose.msra.mxu0 0.0
    %355 = vmatprep.subr.mxu0 0.0
    %356 = vmatpush1.xpose.msra.mxu0 0.0
    %357 = vmatprep.subr.mxu0 0.0
    %358 = vmatpush1.xpose.msra.mxu0 0.0
    %359 = vmatprep.subr.mxu0 0.0
    %360 = vmatpush1.xpose.msra.mxu0 0.0
    %361 = vmatprep.subr.mxu0 0.0
    %362 = vmatpush1.xpose.msra.mxu0 0.0
    %363 = vmatprep.subr.mxu0 0.0
    %364 = vmatpush1.xpose.msra.mxu0 0.0
    %365 = vmatprep.subr.mxu0 0.0
    %366 = vmatpush1.xpose.msra.mxu0 0.0
    %367 = vmatprep.subr.mxu0 0.0
    %368 = vmatpush1.xpose.msra.mxu0 0.0
    %369 = vmatprep.subr.mxu0 0.0
    %370 = vmatpush1.xpose.msra.mxu0 0.0
    %371 = vmatprep.subr.mxu0 0.0
    %372 = vmatpush1.xpose.msra.mxu0 0.0
    %373 = vmatprep.subr.mxu0 0.0
    %374 = vmatpush1.xpose.msra.mxu0 0.0
    %375 = vmatprep.subr.mxu0 0.0
    %376 = vmatpush1.xpose.msra.mxu0 0.0
    %377 = vmatprep.subr.mxu0 0.0
    %378 = vmatpush1.xpose.msra.mxu0 0.0
    %379 = vmatprep.subr.mxu0 0.0
    %380 = vmatpush1.xpose.msra.mxu0 0.0
    %381 = vmatprep.subr.mxu0 0.0
    %382 = vmatpush1.xpose.msra.mxu0 0.0
    %383 = vmatprep.subr.mxu0 0.0
    %384 = vmatpush1.xpose.msra.mxu0 0.0
    %385 = vmatprep.subr.mxu0 0.0
    %386 = vmatpush1.xpose.msra.mxu0 0.0
    %387 = vmatprep.subr.mxu0 0.0
    %388 = vmatpush1.xpose.msra.mxu0 0.0
    %389 = vmatprep.subr.mxu0 0.0
    %390 = vmatpush1.xpose.msra.mxu0 0.0
    %391 = vmatprep.subr.mxu0 0.0
    %392 = vmatpush1.xpose.msra.mxu0 0.0
    %393 = vmatprep.mubr.f32.mxu0 0.0
    %394 = vmatmul.mubr.f32.gmra.mrb[0].mxu0 %v325
    %v395 = vpop.f32.mrb[0].mxu0
    %v396 = vadd.f32 0.0, %v395
    %v397 = vpop.f32.mrb[0].mxu0
    %398 = vdwg.mxu0
    %399 = vrot.lane.b32.xlu0 %v161, 96
    %v400 = vpop.permute.xlu0 %399
    %v401 = vsel %vm172, %v161, 0
    %v403 = vsel %vm172, %v400, 0
    %405 = vmatprep.subr.mxu0 0.0
    %406 = vmatpush1.xpose.msra.mxu0 %v403
    %407 = vmatprep.subr.mxu0 0.0
    %408 = vmatpush1.xpose.msra.mxu0 0.0
    %409 = vmatprep.subr.mxu0 0.0
    %410 = vmatpush1.xpose.msra.mxu0 0.0
    %411 = vmatprep.subr.mxu0 0.0
    %412 = vmatpush1.xpose.msra.mxu0 0.0
    %413 = vmatprep.subr.mxu0 0.0
    %414 = vmatpush1.xpose.msra.mxu0 0.0
    %415 = vmatprep.subr.mxu0 0.0
    %416 = vmatpush1.xpose.msra.mxu0 0.0
    %417 = vmatprep.subr.mxu0 0.0
    %418 = vmatpush1.xpose.msra.mxu0 0.0
    %419 = vmatprep.subr.mxu0 0.0
    %420 = vmatpush1.xpose.msra.mxu0 0.0
    %421 = vmatprep.subr.mxu0 0.0
    %422 = vmatpush1.xpose.msra.mxu0 0.0
    %423 = vmatprep.subr.mxu0 0.0
    %424 = vmatpush1.xpose.msra.mxu0 0.0
    %425 = vmatprep.subr.mxu0 0.0
    %426 = vmatpush1.xpose.msra.mxu0 0.0
    %427 = vmatprep.subr.mxu0 0.0
    %428 = vmatpush1.xpose.msra.mxu0 0.0
    %429 = vmatprep.subr.mxu0 0.0
    %430 = vmatpush1.xpose.msra.mxu0 0.0
    %431 = vmatprep.subr.mxu0 0.0
    %432 = vmatpush1.xpose.msra.mxu0 0.0
    %433 = vmatprep.subr.mxu0 0.0
    %434 = vmatpush1.xpose.msra.mxu0 0.0
    %435 = vmatprep.subr.mxu0 0.0
    %436 = vmatpush1.xpose.msra.mxu0 0.0
    %437 = vmatprep.subr.mxu0 0.0
    %438 = vmatpush1.xpose.msra.mxu0 0.0
    %439 = vmatprep.subr.mxu0 0.0
    %440 = vmatpush1.xpose.msra.mxu0 0.0
    %441 = vmatprep.subr.mxu0 0.0
    %442 = vmatpush1.xpose.msra.mxu0 0.0
    %443 = vmatprep.subr.mxu0 0.0
    %444 = vmatpush1.xpose.msra.mxu0 0.0
    %445 = vmatprep.subr.mxu0 0.0
    %446 = vmatpush1.xpose.msra.mxu0 0.0
    %447 = vmatprep.subr.mxu0 0.0
    %448 = vmatpush1.xpose.msra.mxu0 0.0
    %449 = vmatprep.subr.mxu0 0.0
    %450 = vmatpush1.xpose.msra.mxu0 0.0
    %451 = vmatprep.subr.mxu0 0.0
    %452 = vmatpush1.xpose.msra.mxu0 0.0
    %453 = vmatprep.subr.mxu0 0.0
    %454 = vmatpush1.xpose.msra.mxu0 0.0
    %455 = vmatprep.subr.mxu0 0.0
    %456 = vmatpush1.xpose.msra.mxu0 0.0
    %457 = vmatprep.subr.mxu0 0.0
    %458 = vmatpush1.xpose.msra.mxu0 0.0
    %459 = vmatprep.subr.mxu0 0.0
    %460 = vmatpush1.xpose.msra.mxu0 0.0
    %461 = vmatprep.subr.mxu0 0.0
    %462 = vmatpush1.xpose.msra.mxu0 0.0
    %463 = vmatprep.subr.mxu0 0.0
    %464 = vmatpush1.xpose.msra.mxu0 0.0
    %465 = vmatprep.subr.mxu0 0.0
    %466 = vmatpush1.xpose.msra.mxu0 0.0
    %467 = vmatprep.subr.mxu0 0.0
    %468 = vmatpush1.xpose.msra.mxu0 0.0
    %469 = vmatprep.mubr.f32.mxu0 0.0
    %470 = vmatmul.mubr.f32.gmra.mrb[0].mxu0 %v401
    %v471 = vpop.f32.mrb[0].mxu0
    %v472 = vadd.f32 0.0, %v471
    %v473 = vpop.f32.mrb[0].mxu0
    %474 = vdwg.mxu0
    %475 = vrot.lane.b32.xlu0 %v163, 96
    %v476 = vpop.permute.xlu0 %475
    %v477 = vsel %vm172, %v163, 0
    %v479 = vsel %vm172, %v476, 0
    %481 = vmatprep.subr.mxu0 0.0
    %482 = vmatpush1.xpose.msra.mxu0 %v479
    %483 = vmatprep.subr.mxu0 0.0
    %484 = vmatpush1.xpose.msra.mxu0 0.0
    %485 = vmatprep.subr.mxu0 0.0
    %486 = vmatpush1.xpose.msra.mxu0 0.0
    %487 = vmatprep.subr.mxu0 0.0
    %488 = vmatpush1.xpose.msra.mxu0 0.0
    %489 = vmatprep.subr.mxu0 0.0
    %490 = vmatpush1.xpose.msra.mxu0 0.0
    %491 = vmatprep.subr.mxu0 0.0
    %492 = vmatpush1.xpose.msra.mxu0 0.0
    %493 = vmatprep.subr.mxu0 0.0
    %494 = vmatpush1.xpose.msra.mxu0 0.0
    %495 = vmatprep.subr.mxu0 0.0
    %496 = vmatpush1.xpose.msra.mxu0 0.0
    %497 = vmatprep.subr.mxu0 0.0
    %498 = vmatpush1.xpose.msra.mxu0 0.0
    %499 = vmatprep.subr.mxu0 0.0
    %500 = vmatpush1.xpose.msra.mxu0 0.0
    %501 = vmatprep.subr.mxu0 0.0
    %502 = vmatpush1.xpose.msra.mxu0 0.0
    %503 = vmatprep.subr.mxu0 0.0
    %504 = vmatpush1.xpose.msra.mxu0 0.0
    %505 = vmatprep.subr.mxu0 0.0
    %506 = vmatpush1.xpose.msra.mxu0 0.0
    %507 = vmatprep.subr.mxu0 0.0
    %508 = vmatpush1.xpose.msra.mxu0 0.0
    %509 = vmatprep.subr.mxu0 0.0
    %510 = vmatpush1.xpose.msra.mxu0 0.0
    %511 = vmatprep.subr.mxu0 0.0
    %512 = vmatpush1.xpose.msra.mxu0 0.0
    %513 = vmatprep.subr.mxu0 0.0
    %514 = vmatpush1.xpose.msra.mxu0 0.0
    %515 = vmatprep.subr.mxu0 0.0
    %516 = vmatpush1.xpose.msra.mxu0 0.0
    %517 = vmatprep.subr.mxu0 0.0
    %518 = vmatpush1.xpose.msra.mxu0 0.0
    %519 = vmatprep.subr.mxu0 0.0
    %520 = vmatpush1.xpose.msra.mxu0 0.0
    %521 = vmatprep.subr.mxu0 0.0
    %522 = vmatpush1.xpose.msra.mxu0 0.0
    %523 = vmatprep.subr.mxu0 0.0
    %524 = vmatpush1.xpose.msra.mxu0 0.0
    %525 = vmatprep.subr.mxu0 0.0
    %526 = vmatpush1.xpose.msra.mxu0 0.0
    %527 = vmatprep.subr.mxu0 0.0
    %528 = vmatpush1.xpose.msra.mxu0 0.0
    %529 = vmatprep.subr.mxu0 0.0
    %530 = vmatpush1.xpose.msra.mxu0 0.0
    %531 = vmatprep.subr.mxu0 0.0
    %532 = vmatpush1.xpose.msra.mxu0 0.0
    %533 = vmatprep.subr.mxu0 0.0
    %534 = vmatpush1.xpose.msra.mxu0 0.0
    %535 = vmatprep.subr.mxu0 0.0
    %536 = vmatpush1.xpose.msra.mxu0 0.0
    %537 = vmatprep.subr.mxu0 0.0
    %538 = vmatpush1.xpose.msra.mxu0 0.0
    %539 = vmatprep.subr.mxu0 0.0
    %540 = vmatpush1.xpose.msra.mxu0 0.0
    %541 = vmatprep.subr.mxu0 0.0
    %542 = vmatpush1.xpose.msra.mxu0 0.0
    %543 = vmatprep.subr.mxu0 0.0
    %544 = vmatpush1.xpose.msra.mxu0 0.0
    %545 = vmatprep.mubr.f32.mxu0 0.0
    %546 = vmatmul.mubr.f32.gmra.mrb[0].mxu0 %v477
    %v547 = vpop.f32.mrb[0].mxu0
    %v548 = vadd.f32 0.0, %v547
    %v549 = vpop.f32.mrb[0].mxu0
    %550 = vdwg.mxu0
    %551 = vrot.lane.b32.xlu0 %v165, 96
    %v552 = vpop.permute.xlu0 %551
    %v553 = vsel %vm172, %v165, 0
    %v555 = vsel %vm172, %v552, 0
    %557 = vmatprep.subr.mxu0 0.0
    %558 = vmatpush1.xpose.msra.mxu0 %v555
    %559 = vmatprep.subr.mxu0 0.0
    %560 = vmatpush1.xpose.msra.mxu0 0.0
    %561 = vmatprep.subr.mxu0 0.0
    %562 = vmatpush1.xpose.msra.mxu0 0.0
    %563 = vmatprep.subr.mxu0 0.0
    %564 = vmatpush1.xpose.msra.mxu0 0.0
    %565 = vmatprep.subr.mxu0 0.0
    %566 = vmatpush1.xpose.msra.mxu0 0.0
    %567 = vmatprep.subr.mxu0 0.0
    %568 = vmatpush1.xpose.msra.mxu0 0.0
    %569 = vmatprep.subr.mxu0 0.0
    %570 = vmatpush1.xpose.msra.mxu0 0.0
    %571 = vmatprep.subr.mxu0 0.0
    %572 = vmatpush1.xpose.msra.mxu0 0.0
    %573 = vmatprep.subr.mxu0 0.0
    %574 = vmatpush1.xpose.msra.mxu0 0.0
    %575 = vmatprep.subr.mxu0 0.0
    %576 = vmatpush1.xpose.msra.mxu0 0.0
    %577 = vmatprep.subr.mxu0 0.0
    %578 = vmatpush1.xpose.msra.mxu0 0.0
    %579 = vmatprep.subr.mxu0 0.0
    %580 = vmatpush1.xpose.msra.mxu0 0.0
    %581 = vmatprep.subr.mxu0 0.0
    %582 = vmatpush1.xpose.msra.mxu0 0.0
    %583 = vmatprep.subr.mxu0 0.0
    %584 = vmatpush1.xpose.msra.mxu0 0.0
    %585 = vmatprep.subr.mxu0 0.0
    %586 = vmatpush1.xpose.msra.mxu0 0.0
    %587 = vmatprep.subr.mxu0 0.0
    %588 = vmatpush1.xpose.msra.mxu0 0.0
    %589 = vmatprep.subr.mxu0 0.0
    %590 = vmatpush1.xpose.msra.mxu0 0.0
    %591 = vmatprep.subr.mxu0 0.0
    %592 = vmatpush1.xpose.msra.mxu0 0.0
    %593 = vmatprep.subr.mxu0 0.0
    %594 = vmatpush1.xpose.msra.mxu0 0.0
    %595 = vmatprep.subr.mxu0 0.0
    %596 = vmatpush1.xpose.msra.mxu0 0.0
    %597 = vmatprep.subr.mxu0 0.0
    %598 = vmatpush1.xpose.msra.mxu0 0.0
    %599 = vmatprep.subr.mxu0 0.0
    %600 = vmatpush1.xpose.msra.mxu0 0.0
    %601 = vmatprep.subr.mxu0 0.0
    %602 = vmatpush1.xpose.msra.mxu0 0.0
    %603 = vmatprep.subr.mxu0 0.0
    %604 = vmatpush1.xpose.msra.mxu0 0.0
    %605 = vmatprep.subr.mxu0 0.0
    %606 = vmatpush1.xpose.msra.mxu0 0.0
    %607 = vmatprep.subr.mxu0 0.0
    %608 = vmatpush1.xpose.msra.mxu0 0.0
    %609 = vmatprep.subr.mxu0 0.0
    %610 = vmatpush1.xpose.msra.mxu0 0.0
    %611 = vmatprep.subr.mxu0 0.0
    %612 = vmatpush1.xpose.msra.mxu0 0.0
    %613 = vmatprep.subr.mxu0 0.0
    %614 = vmatpush1.xpose.msra.mxu0 0.0
    %615 = vmatprep.subr.mxu0 0.0
    %616 = vmatpush1.xpose.msra.mxu0 0.0
    %617 = vmatprep.subr.mxu0 0.0
    %618 = vmatpush1.xpose.msra.mxu0 0.0
    %619 = vmatprep.subr.mxu0 0.0
    %620 = vmatpush1.xpose.msra.mxu0 0.0
    %621 = vmatprep.mubr.f32.mxu0 0.0
    %622 = vmatmul.mubr.f32.gmra.mrb[0].mxu0 %v553
    %v623 = vpop.f32.mrb[0].mxu0
    %v624 = vadd.f32 0.0, %v623
    %v625 = vpop.f32.mrb[0].mxu0
    %626 = vdwg.mxu0
    %627 = vrot.lane.b32.xlu0 %v167, 96
    %v628 = vpop.permute.xlu0 %627
    %v629 = vsel %vm172, %v167, 0
    %v631 = vsel %vm172, %v628, 0
    %633 = vmatprep.subr.mxu0 0.0
    %634 = vmatpush1.xpose.msra.mxu0 %v631
    %635 = vmatprep.subr.mxu0 0.0
    %636 = vmatpush1.xpose.msra.mxu0 0.0
    %637 = vmatprep.subr.mxu0 0.0
    %638 = vmatpush1.xpose.msra.mxu0 0.0
    %639 = vmatprep.subr.mxu0 0.0
    %640 = vmatpush1.xpose.msra.mxu0 0.0
    %641 = vmatprep.subr.mxu0 0.0
    %642 = vmatpush1.xpose.msra.mxu0 0.0
    %643 = vmatprep.subr.mxu0 0.0
    %644 = vmatpush1.xpose.msra.mxu0 0.0
    %645 = vmatprep.subr.mxu0 0.0
    %646 = vmatpush1.xpose.msra.mxu0 0.0
    %647 = vmatprep.subr.mxu0 0.0
    %648 = vmatpush1.xpose.msra.mxu0 0.0
    %649 = vmatprep.subr.mxu0 0.0
    %650 = vmatpush1.xpose.msra.mxu0 0.0
    %651 = vmatprep.subr.mxu0 0.0
    %652 = vmatpush1.xpose.msra.mxu0 0.0
    %653 = vmatprep.subr.mxu0 0.0
    %654 = vmatpush1.xpose.msra.mxu0 0.0
    %655 = vmatprep.subr.mxu0 0.0
    %656 = vmatpush1.xpose.msra.mxu0 0.0
    %657 = vmatprep.subr.mxu0 0.0
    %658 = vmatpush1.xpose.msra.mxu0 0.0
    %659 = vmatprep.subr.mxu0 0.0
    %660 = vmatpush1.xpose.msra.mxu0 0.0
    %661 = vmatprep.subr.mxu0 0.0
    %662 = vmatpush1.xpose.msra.mxu0 0.0
    %663 = vmatprep.subr.mxu0 0.0
    %664 = vmatpush1.xpose.msra.mxu0 0.0
    %665 = vmatprep.subr.mxu0 0.0
    %666 = vmatpush1.xpose.msra.mxu0 0.0
    %667 = vmatprep.subr.mxu0 0.0
    %668 = vmatpush1.xpose.msra.mxu0 0.0
    %669 = vmatprep.subr.mxu0 0.0
    %670 = vmatpush1.xpose.msra.mxu0 0.0
    %671 = vmatprep.subr.mxu0 0.0
    %672 = vmatpush1.xpose.msra.mxu0 0.0
    %673 = vmatprep.subr.mxu0 0.0
    %674 = vmatpush1.xpose.msra.mxu0 0.0
    %675 = vmatprep.subr.mxu0 0.0
    %676 = vmatpush1.xpose.msra.mxu0 0.0
    %677 = vmatprep.subr.mxu0 0.0
    %678 = vmatpush1.xpose.msra.mxu0 0.0
    %679 = vmatprep.subr.mxu0 0.0
    %680 = vmatpush1.xpose.msra.mxu0 0.0
    %681 = vmatprep.subr.mxu0 0.0
    %682 = vmatpush1.xpose.msra.mxu0 0.0
    %683 = vmatprep.subr.mxu0 0.0
    %684 = vmatpush1.xpose.msra.mxu0 0.0
    %685 = vmatprep.subr.mxu0 0.0
    %686 = vmatpush1.xpose.msra.mxu0 0.0
    %687 = vmatprep.subr.mxu0 0.0
    %688 = vmatpush1.xpose.msra.mxu0 0.0
    %689 = vmatprep.subr.mxu0 0.0
    %690 = vmatpush1.xpose.msra.mxu0 0.0
    %691 = vmatprep.subr.mxu0 0.0
    %692 = vmatpush1.xpose.msra.mxu0 0.0
    %693 = vmatprep.subr.mxu0 0.0
    %694 = vmatpush1.xpose.msra.mxu0 0.0
    %695 = vmatprep.subr.mxu0 0.0
    %696 = vmatpush1.xpose.msra.mxu0 0.0
    %697 = vmatprep.mubr.f32.mxu0 0.0
    %698 = vmatmul.mubr.f32.gmra.mrb[0].mxu0 %v629
    %v699 = vpop.f32.mrb[0].mxu0
    %v700 = vadd.f32 0.0, %v699
    %v701 = vpop.f32.mrb[0].mxu0
    %702 = vdwg.mxu0
    %703 = vrot.lane.b32.xlu0 %v169, 96
    %v704 = vpop.permute.xlu0 %703
    %v705 = vsel %vm172, %v169, 0
    %v707 = vsel %vm172, %v704, 0
    %709 = vmatprep.subr.mxu0 0.0
    %710 = vmatpush1.xpose.msra.mxu0 %v707
    %711 = vmatprep.subr.mxu0 0.0
    %712 = vmatpush1.xpose.msra.mxu0 0.0
    %713 = vmatprep.subr.mxu0 0.0
    %714 = vmatpush1.xpose.msra.mxu0 0.0
    %715 = vmatprep.subr.mxu0 0.0
    %716 = vmatpush1.xpose.msra.mxu0 0.0
    %717 = vmatprep.subr.mxu0 0.0
    %718 = vmatpush1.xpose.msra.mxu0 0.0
    %719 = vmatprep.subr.mxu0 0.0
    %720 = vmatpush1.xpose.msra.mxu0 0.0
    %721 = vmatprep.subr.mxu0 0.0
    %722 = vmatpush1.xpose.msra.mxu0 0.0
    %723 = vmatprep.subr.mxu0 0.0
    %724 = vmatpush1.xpose.msra.mxu0 0.0
    %725 = vmatprep.subr.mxu0 0.0
    %726 = vmatpush1.xpose.msra.mxu0 0.0
    %727 = vmatprep.subr.mxu0 0.0
    %728 = vmatpush1.xpose.msra.mxu0 0.0
    %729 = vmatprep.subr.mxu0 0.0
    %730 = vmatpush1.xpose.msra.mxu0 0.0
    %731 = vmatprep.subr.mxu0 0.0
    %732 = vmatpush1.xpose.msra.mxu0 0.0
    %733 = vmatprep.subr.mxu0 0.0
    %734 = vmatpush1.xpose.msra.mxu0 0.0
    %735 = vmatprep.subr.mxu0 0.0
    %736 = vmatpush1.xpose.msra.mxu0 0.0
    %737 = vmatprep.subr.mxu0 0.0
    %738 = vmatpush1.xpose.msra.mxu0 0.0
    %739 = vmatprep.subr.mxu0 0.0
    %740 = vmatpush1.xpose.msra.mxu0 0.0
    %741 = vmatprep.subr.mxu0 0.0
    %742 = vmatpush1.xpose.msra.mxu0 0.0
    %743 = vmatprep.subr.mxu0 0.0
    %744 = vmatpush1.xpose.msra.mxu0 0.0
    %745 = vmatprep.subr.mxu0 0.0
    %746 = vmatpush1.xpose.msra.mxu0 0.0
    %747 = vmatprep.subr.mxu0 0.0
    %748 = vmatpush1.xpose.msra.mxu0 0.0
    %749 = vmatprep.subr.mxu0 0.0
    %750 = vmatpush1.xpose.msra.mxu0 0.0
    %751 = vmatprep.subr.mxu0 0.0
    %752 = vmatpush1.xpose.msra.mxu0 0.0
    %753 = vmatprep.subr.mxu0 0.0
    %754 = vmatpush1.xpose.msra.mxu0 0.0
    %755 = vmatprep.subr.mxu0 0.0
    %756 = vmatpush1.xpose.msra.mxu0 0.0
    %757 = vmatprep.subr.mxu0 0.0
    %758 = vmatpush1.xpose.msra.mxu0 0.0
    %759 = vmatprep.subr.mxu0 0.0
    %760 = vmatpush1.xpose.msra.mxu0 0.0
    %761 = vmatprep.subr.mxu0 0.0
    %762 = vmatpush1.xpose.msra.mxu0 0.0
    %763 = vmatprep.subr.mxu0 0.0
    %764 = vmatpush1.xpose.msra.mxu0 0.0
    %765 = vmatprep.subr.mxu0 0.0
    %766 = vmatpush1.xpose.msra.mxu0 0.0
    %767 = vmatprep.subr.mxu0 0.0
    %768 = vmatpush1.xpose.msra.mxu0 0.0
    %769 = vmatprep.subr.mxu0 0.0
    %770 = vmatpush1.xpose.msra.mxu0 0.0
    %771 = vmatprep.subr.mxu0 0.0
    %772 = vmatpush1.xpose.msra.mxu0 0.0
    %773 = vmatprep.mubr.f32.mxu0 0.0
    %774 = vmatmul.mubr.f32.gmra.mrb[0].mxu0 %v705
    %v775 = vpop.f32.mrb[0].mxu0
    %v776 = vadd.f32 0.0, %v775
    %v777 = vpop.f32.mrb[0].mxu0
    %778 = vdwg.mxu0
    %v779 = vld [vmem:[#allocation5] sm:$0xff]
    %v780 = vld [vmem:[#allocation5 + $0x8] sm:$0xff]
    %vm781 = vcmp.gt.f32.partialorder %v779, 0.0
    %vm782 = vcmp.gt.f32.partialorder %v780, 0.0
    %v783 = vsel %vm781, 1, 0
    %v784 = vsel %vm782, 1, 0
    %vm785 = vcmp.eq.s32.totalorder %v783, 1
    %vm786 = vcmp.eq.s32.totalorder %v784, 1
    %v787 = vsel %vm785, -1e+09, %v244
    %v788 = vsel %vm786, -1e+09, %v320
    %v789 = vsel %vm785, -1e+09, %v396
    %v790 = vsel %vm786, -1e+09, %v472
    %v791 = vsel %vm785, -1e+09, %v548
    %v792 = vsel %vm786, -1e+09, %v624
    %v793 = vsel %vm785, -1e+09, %v700
    %v794 = vsel %vm786, -1e+09, %v776
    %v795 = vsel %vm172, %v787, -inf
    %796 = vmax.xlane.f32.xlu0 %v795
    %v797 = vpop.xlane.xlu0 %796
    %v798 = vsel %vm172, %v788, -inf
    %799 = vmax.xlane.f32.xlu0 %v798
    %v800 = vpop.xlane.xlu0 %799
    %v801 = vsel %vm172, %v789, -inf
    %802 = vmax.xlane.f32.xlu0 %v801
    %v803 = vpop.xlane.xlu0 %802
    %v804 = vsel %vm172, %v790, -inf
    %805 = vmax.xlane.f32.xlu0 %v804
    %v806 = vpop.xlane.xlu0 %805
    %v807 = vsel %vm172, %v791, -inf
    %808 = vmax.xlane.f32.xlu0 %v807
    %v809 = vpop.xlane.xlu0 %808
    %v810 = vsel %vm172, %v792, -inf
    %811 = vmax.xlane.f32.xlu0 %v810
    %v812 = vpop.xlane.xlu0 %811
    %v813 = vsel %vm172, %v793, -inf
    %814 = vmax.xlane.f32.xlu0 %v813
    %v815 = vpop.xlane.xlu0 %814
    %v816 = vsel %vm172, %v794, -inf
    %817 = vmax.xlane.f32.xlu0 %v816
    %v818 = vpop.xlane.xlu0 %817
    %v819 = vsub.f32 %v787, %v797
    %v820 = vsub.f32 %v788, %v800
    %v821 = vsub.f32 %v789, %v803
    %v822 = vsub.f32 %v790, %v806
    %v823 = vsub.f32 %v791, %v809
    %v824 = vsub.f32 %v792, %v812
    %v825 = vsub.f32 %v793, %v815
    %v826 = vsub.f32 %v794, %v818
    %v827 = vmul.f32 %v819, 1.442695
    %v828 = vpow.pop %v827
    %v829 = vmul.f32 %v820, 1.442695
    %v830 = vpow.pop %v829
    %v831 = vmul.f32 %v821, 1.442695
    %v832 = vpow.pop %v831
    %v833 = vmul.f32 %v822, 1.442695
    %v834 = vpow.pop %v833
    %v835 = vmul.f32 %v823, 1.442695
    %v836 = vpow.pop %v835
    %v837 = vmul.f32 %v824, 1.442695
    %v838 = vpow.pop %v837
    %v839 = vmul.f32 %v825, 1.442695
    %v840 = vpow.pop %v839
    %v841 = vmul.f32 %v826, 1.442695
    %v842 = vpow.pop %v841
    %v843 = vsel %vm172, %v828, 0.0
    %844 = vadd.xlane.f32.xlu0 %v843
    %v845 = vpop.xlane.xlu0 %844
    %v846 = vsel %vm172, %v830, 0.0
    %847 = vadd.xlane.f32.xlu0 %v846
    %v848 = vpop.xlane.xlu0 %847
    %v849 = vsel %vm172, %v832, 0.0
    %850 = vadd.xlane.f32.xlu0 %v849
    %v851 = vpop.xlane.xlu0 %850
    %v852 = vsel %vm172, %v834, 0.0
    %853 = vadd.xlane.f32.xlu0 %v852
    %v854 = vpop.xlane.xlu0 %853
    %v855 = vsel %vm172, %v836, 0.0
    %856 = vadd.xlane.f32.xlu0 %v855
    %v857 = vpop.xlane.xlu0 %856
    %v858 = vsel %vm172, %v838, 0.0
    %859 = vadd.xlane.f32.xlu0 %v858
    %v860 = vpop.xlane.xlu0 %859
    %v861 = vsel %vm172, %v840, 0.0
    %862 = vadd.xlane.f32.xlu0 %v861
    %v863 = vpop.xlane.xlu0 %862
    %v864 = vsel %vm172, %v842, 0.0
    %865 = vadd.xlane.f32.xlu0 %v864
    %v866 = vpop.xlane.xlu0 %865
    %v867 = vrcp.pop %v845
    %v868 = vrcp.pop %v848
    %v869 = vrcp.pop %v851
    %v870 = vrcp.pop %v854
    %v871 = vrcp.pop %v857
    %v872 = vrcp.pop %v860
    %v873 = vrcp.pop %v863
    %v874 = vrcp.pop %v866
    %v875 = vmul.f32 %v845, %v867
    %v876 = vmul.f32 %v848, %v868
    %v877 = vmul.f32 %v851, %v869
    %v878 = vmul.f32 %v854, %v870
    %v879 = vmul.f32 %v857, %v871
    %v880 = vmul.f32 %v860, %v872
    %v881 = vmul.f32 %v863, %v873
    %v882 = vmul.f32 %v866, %v874
    %v883 = vsub.f32 2.0, %v875
    %v884 = vsub.f32 2.0, %v876
    %v885 = vsub.f32 2.0, %v877
    %v886 = vsub.f32 2.0, %v878
    %v887 = vsub.f32 2.0, %v879
    %v888 = vsub.f32 2.0, %v880
    %v889 = vsub.f32 2.0, %v881
    %v890 = vsub.f32 2.0, %v882
    %v891 = vmul.f32 %v867, %v883
    %v892 = vmul.f32 %v868, %v884
    %v893 = vmul.f32 %v869, %v885
    %v894 = vmul.f32 %v870, %v886
    %v895 = vmul.f32 %v871, %v887
    %v896 = vmul.f32 %v872, %v888
    %v897 = vmul.f32 %v873, %v889
    %v898 = vmul.f32 %v874, %v890
    %v899 = vmul.f32 %v828, %v891
    %v900 = vmul.f32 %v830, %v892
    %v901 = vmul.f32 %v832, %v893
    %v902 = vmul.f32 %v834, %v894
    %v903 = vmul.f32 %v836, %v895
    %v904 = vmul.f32 %v838, %v896
    %v905 = vmul.f32 %v840, %v897
    %v906 = vmul.f32 %v842, %v898
    %907 = vst.msk [vmem:[%s9] sm:$0xff] %vm172, %v899
    %908 = vst.msk [vmem:[%s9 + $0x8] sm:$0xff] %vm172, %v900
    %909 = vst.msk [vmem:[%s9 + $0x10] sm:$0xff] %vm172, %v901
    %910 = vst.msk [vmem:[%s9 + $0x18] sm:$0xff] %vm172, %v902
    %911 = vst.msk [vmem:[%s9 + $0x20] sm:$0xff] %vm172, %v903
    %912 = vst.msk [vmem:[%s9 + $0x28] sm:$0xff] %vm172, %v904
    %913 = vst.msk [vmem:[%s9 + $0x30] sm:$0xff] %vm172, %v905
    %914 = vst.msk [vmem:[%s9 + $0x38] sm:$0xff] %vm172, %v906
    %915 = vrot.lane.b32.xlu0 %v148, 64
    %v916 = vpop.permute.xlu0 %915
    %v919 = vsel %vm172, %v899, 0
    %921 = vmatprep.subr.mxu0 0.0
    %922 = vmatpush1.msra.mxu0 %v916
    %923 = vmatprep.subr.mxu0 0.0
    %924 = vmatpush1.msra.mxu0 0.0
    %925 = vmatprep.subr.mxu0 0.0
    %926 = vmatpush1.msra.mxu0 0.0
    %927 = vmatprep.subr.mxu0 0.0
    %928 = vmatpush1.msra.mxu0 0.0
    %929 = vmatprep.subr.mxu0 0.0
    %930 = vmatpush1.msra.mxu0 0.0
    %931 = vmatprep.subr.mxu0 0.0
    %932 = vmatpush1.msra.mxu0 0.0
    %933 = vmatprep.subr.mxu0 0.0
    %934 = vmatpush1.msra.mxu0 0.0
    %935 = vmatprep.subr.mxu0 0.0
    %936 = vmatpush1.msra.mxu0 0.0
    %937 = vmatprep.subr.mxu0 0.0
    %938 = vmatpush1.msra.mxu0 0.0
    %939 = vmatprep.subr.mxu0 0.0
    %940 = vmatpush1.msra.mxu0 0.0
    %941 = vmatprep.subr.mxu0 0.0
    %942 = vmatpush1.msra.mxu0 0.0
    %943 = vmatprep.subr.mxu0 0.0
    %944 = vmatpush1.msra.mxu0 0.0
    %945 = vmatprep.subr.mxu0 0.0
    %946 = vmatpush1.msra.mxu0 0.0
    %947 = vmatprep.subr.mxu0 0.0
    %948 = vmatpush1.msra.mxu0 0.0
    %949 = vmatprep.subr.mxu0 0.0
    %950 = vmatpush1.msra.mxu0 0.0
    %951 = vmatprep.subr.mxu0 0.0
    %952 = vmatpush1.msra.mxu0 0.0
    %953 = vmatprep.subr.mxu0 0.0
    %954 = vmatpush1.msra.mxu0 0.0
    %955 = vmatprep.subr.mxu0 0.0
    %956 = vmatpush1.msra.mxu0 0.0
    %957 = vmatprep.subr.mxu0 0.0
    %958 = vmatpush1.msra.mxu0 0.0
    %959 = vmatprep.subr.mxu0 0.0
    %960 = vmatpush1.msra.mxu0 0.0
    %961 = vmatprep.subr.mxu0 0.0
    %962 = vmatpush1.msra.mxu0 0.0
    %963 = vmatprep.subr.mxu0 0.0
    %964 = vmatpush1.msra.mxu0 0.0
    %965 = vmatprep.subr.mxu0 0.0
    %966 = vmatpush1.msra.mxu0 0.0
    %967 = vmatprep.subr.mxu0 0.0
    %968 = vmatpush1.msra.mxu0 0.0
    %969 = vmatprep.subr.mxu0 0.0
    %970 = vmatpush1.msra.mxu0 0.0
    %971 = vmatprep.subr.mxu0 0.0
    %972 = vmatpush1.msra.mxu0 0.0
    %973 = vmatprep.subr.mxu0 0.0
    %974 = vmatpush1.msra.mxu0 0.0
    %975 = vmatprep.subr.mxu0 0.0
    %976 = vmatpush1.msra.mxu0 0.0
    %977 = vmatprep.subr.mxu0 0.0
    %978 = vmatpush1.msra.mxu0 0.0
    %979 = vmatprep.subr.mxu0 0.0
    %980 = vmatpush1.msra.mxu0 0.0
    %981 = vmatprep.subr.mxu0 0.0
    %982 = vmatpush1.msra.mxu0 0.0
    %983 = vmatprep.subr.mxu0 0.0
    %984 = vmatpush1.msra.mxu0 0.0
    %985 = vmatprep.mubr.f32.mxu0 0.0
    %986 = vmatmul.mubr.f32.gmra.mrb[0].mxu0 %v919
    %v987 = vpop.f32.mrb[0].mxu0
    %v988 = vadd.f32 0.0, %v987
    %v989 = vpop.f32.mrb[0].mxu0
    %990 = vdwg.mxu0
    %991 = vrot.lane.b32.xlu0 %v153, 64
    %v992 = vpop.permute.xlu0 %991
    %v995 = vsel %vm172, %v900, 0
    %997 = vmatprep.subr.mxu0 0.0
    %998 = vmatpush1.msra.mxu0 %v992
    %999 = vmatprep.subr.mxu0 0.0
    %1000 = vmatpush1.msra.mxu0 0.0
    %1001 = vmatprep.subr.mxu0 0.0
    %1002 = vmatpush1.msra.mxu0 0.0
    %1003 = vmatprep.subr.mxu0 0.0
    %1004 = vmatpush1.msra.mxu0 0.0
    %1005 = vmatprep.subr.mxu0 0.0
    %1006 = vmatpush1.msra.mxu0 0.0
    %1007 = vmatprep.subr.mxu0 0.0
    %1008 = vmatpush1.msra.mxu0 0.0
    %1009 = vmatprep.subr.mxu0 0.0
    %1010 = vmatpush1.msra.mxu0 0.0
    %1011 = vmatprep.subr.mxu0 0.0
    %1012 = vmatpush1.msra.mxu0 0.0
    %1013 = vmatprep.subr.mxu0 0.0
    %1014 = vmatpush1.msra.mxu0 0.0
    %1015 = vmatprep.subr.mxu0 0.0
    %1016 = vmatpush1.msra.mxu0 0.0
    %1017 = vmatprep.subr.mxu0 0.0
    %1018 = vmatpush1.msra.mxu0 0.0
    %1019 = vmatprep.subr.mxu0 0.0
    %1020 = vmatpush1.msra.mxu0 0.0
    %1021 = vmatprep.subr.mxu0 0.0
    %1022 = vmatpush1.msra.mxu0 0.0
    %1023 = vmatprep.subr.mxu0 0.0
    %1024 = vmatpush1.msra.mxu0 0.0
    %1025 = vmatprep.subr.mxu0 0.0
    %1026 = vmatpush1.msra.mxu0 0.0
    %1027 = vmatprep.subr.mxu0 0.0
    %1028 = vmatpush1.msra.mxu0 0.0
    %1029 = vmatprep.subr.mxu0 0.0
    %1030 = vmatpush1.msra.mxu0 0.0
    %1031 = vmatprep.subr.mxu0 0.0
    %1032 = vmatpush1.msra.mxu0 0.0
    %1033 = vmatprep.subr.mxu0 0.0
    %1034 = vmatpush1.msra.mxu0 0.0
    %1035 = vmatprep.subr.mxu0 0.0
    %1036 = vmatpush1.msra.mxu0 0.0
    %1037 = vmatprep.subr.mxu0 0.0
    %1038 = vmatpush1.msra.mxu0 0.0
    %1039 = vmatprep.subr.mxu0 0.0
    %1040 = vmatpush1.msra.mxu0 0.0
    %1041 = vmatprep.subr.mxu0 0.0
    %1042 = vmatpush1.msra.mxu0 0.0
    %1043 = vmatprep.subr.mxu0 0.0
    %1044 = vmatpush1.msra.mxu0 0.0
    %1045 = vmatprep.subr.mxu0 0.0
    %1046 = vmatpush1.msra.mxu0 0.0
    %1047 = vmatprep.subr.mxu0 0.0
    %1048 = vmatpush1.msra.mxu0 0.0
    %1049 = vmatprep.subr.mxu0 0.0
    %1050 = vmatpush1.msra.mxu0 0.0
    %1051 = vmatprep.subr.mxu0 0.0
    %1052 = vmatpush1.msra.mxu0 0.0
    %1053 = vmatprep.subr.mxu0 0.0
    %1054 = vmatpush1.msra.mxu0 0.0
    %1055 = vmatprep.subr.mxu0 0.0
    %1056 = vmatpush1.msra.mxu0 0.0
    %1057 = vmatprep.subr.mxu0 0.0
    %1058 = vmatpush1.msra.mxu0 0.0
    %1059 = vmatprep.subr.mxu0 0.0
    %1060 = vmatpush1.msra.mxu0 0.0
    %1061 = vmatprep.mubr.f32.mxu0 0.0
    %1062 = vmatmul.mubr.f32.gmra.mrb[0].mxu0 %v995
    %v1063 = vpop.f32.mrb[0].mxu0
    %v1064 = vadd.f32 0.0, %v1063
    %v1065 = vpop.f32.mrb[0].mxu0
    %1066 = vdwg.mxu0
    %1067 = vrot.lane.b32.xlu0 %v159, 64
    %v1068 = vpop.permute.xlu0 %1067
    %v1071 = vsel %vm172, %v901, 0
    %1073 = vmatprep.subr.mxu0 0.0
    %1074 = vmatpush1.msra.mxu0 %v1068
    %1075 = vmatprep.subr.mxu0 0.0
    %1076 = vmatpush1.msra.mxu0 0.0
    %1077 = vmatprep.subr.mxu0 0.0
    %1078 = vmatpush1.msra.mxu0 0.0
    %1079 = vmatprep.subr.mxu0 0.0
    %1080 = vmatpush1.msra.mxu0 0.0
    %1081 = vmatprep.subr.mxu0 0.0
    %1082 = vmatpush1.msra.mxu0 0.0
    %1083 = vmatprep.subr.mxu0 0.0
    %1084 = vmatpush1.msra.mxu0 0.0
    %1085 = vmatprep.subr.mxu0 0.0
    %1086 = vmatpush1.msra.mxu0 0.0
    %1087 = vmatprep.subr.mxu0 0.0
    %1088 = vmatpush1.msra.mxu0 0.0
    %1089 = vmatprep.subr.mxu0 0.0
    %1090 = vmatpush1.msra.mxu0 0.0
    %1091 = vmatprep.subr.mxu0 0.0
    %1092 = vmatpush1.msra.mxu0 0.0
    %1093 = vmatprep.subr.mxu0 0.0
    %1094 = vmatpush1.msra.mxu0 0.0
    %1095 = vmatprep.subr.mxu0 0.0
    %1096 = vmatpush1.msra.mxu0 0.0
    %1097 = vmatprep.subr.mxu0 0.0
    %1098 = vmatpush1.msra.mxu0 0.0
    %1099 = vmatprep.subr.mxu0 0.0
    %1100 = vmatpush1.msra.mxu0 0.0
    %1101 = vmatprep.subr.mxu0 0.0
    %1102 = vmatpush1.msra.mxu0 0.0
    %1103 = vmatprep.subr.mxu0 0.0
    %1104 = vmatpush1.msra.mxu0 0.0
    %1105 = vmatprep.subr.mxu0 0.0
    %1106 = vmatpush1.msra.mxu0 0.0
    %1107 = vmatprep.subr.mxu0 0.0
    %1108 = vmatpush1.msra.mxu0 0.0
    %1109 = vmatprep.subr.mxu0 0.0
    %1110 = vmatpush1.msra.mxu0 0.0
    %1111 = vmatprep.subr.mxu0 0.0
    %1112 = vmatpush1.msra.mxu0 0.0
    %1113 = vmatprep.subr.mxu0 0.0
    %1114 = vmatpush1.msra.mxu0 0.0
    %1115 = vmatprep.subr.mxu0 0.0
    %1116 = vmatpush1.msra.mxu0 0.0
    %1117 = vmatprep.subr.mxu0 0.0
    %1118 = vmatpush1.msra.mxu0 0.0
    %1119 = vmatprep.subr.mxu0 0.0
    %1120 = vmatpush1.msra.mxu0 0.0
    %1121 = vmatprep.subr.mxu0 0.0
    %1122 = vmatpush1.msra.mxu0 0.0
    %1123 = vmatprep.subr.mxu0 0.0
    %1124 = vmatpush1.msra.mxu0 0.0
    %1125 = vmatprep.subr.mxu0 0.0
    %1126 = vmatpush1.msra.mxu0 0.0
    %1127 = vmatprep.subr.mxu0 0.0
    %1128 = vmatpush1.msra.mxu0 0.0
    %1129 = vmatprep.subr.mxu0 0.0
    %1130 = vmatpush1.msra.mxu0 0.0
    %1131 = vmatprep.subr.mxu0 0.0
    %1132 = vmatpush1.msra.mxu0 0.0
    %1133 = vmatprep.subr.mxu0 0.0
    %1134 = vmatpush1.msra.mxu0 0.0
    %1135 = vmatprep.subr.mxu0 0.0
    %1136 = vmatpush1.msra.mxu0 0.0
    %1137 = vmatprep.mubr.f32.mxu0 0.0
    %1138 = vmatmul.mubr.f32.gmra.mrb[0].mxu0 %v1071
    %v1139 = vpop.f32.mrb[0].mxu0
    %v1140 = vadd.f32 0.0, %v1139
    %v1141 = vpop.f32.mrb[0].mxu0
    %1142 = vdwg.mxu0
    %1143 = vrot.lane.b32.xlu0 %v161, 64
    %v1144 = vpop.permute.xlu0 %1143
    %v1147 = vsel %vm172, %v902, 0
    %1149 = vmatprep.subr.mxu0 0.0
    %1150 = vmatpush1.msra.mxu0 %v1144
    %1151 = vmatprep.subr.mxu0 0.0
    %1152 = vmatpush1.msra.mxu0 0.0
    %1153 = vmatprep.subr.mxu0 0.0
    %1154 = vmatpush1.msra.mxu0 0.0
    %1155 = vmatprep.subr.mxu0 0.0
    %1156 = vmatpush1.msra.mxu0 0.0
    %1157 = vmatprep.subr.mxu0 0.0
    %1158 = vmatpush1.msra.mxu0 0.0
    %1159 = vmatprep.subr.mxu0 0.0
    %1160 = vmatpush1.msra.mxu0 0.0
    %1161 = vmatprep.subr.mxu0 0.0
    %1162 = vmatpush1.msra.mxu0 0.0
    %1163 = vmatprep.subr.mxu0 0.0
    %1164 = vmatpush1.msra.mxu0 0.0
    %1165 = vmatprep.subr.mxu0 0.0
    %1166 = vmatpush1.msra.mxu0 0.0
    %1167 = vmatprep.subr.mxu0 0.0
    %1168 = vmatpush1.msra.mxu0 0.0
    %1169 = vmatprep.subr.mxu0 0.0
    %1170 = vmatpush1.msra.mxu0 0.0
    %1171 = vmatprep.subr.mxu0 0.0
    %1172 = vmatpush1.msra.mxu0 0.0
    %1173 = vmatprep.subr.mxu0 0.0
    %1174 = vmatpush1.msra.mxu0 0.0
    %1175 = vmatprep.subr.mxu0 0.0
    %1176 = vmatpush1.msra.mxu0 0.0
    %1177 = vmatprep.subr.mxu0 0.0
    %1178 = vmatpush1.msra.mxu0 0.0
    %1179 = vmatprep.subr.mxu0 0.0
    %1180 = vmatpush1.msra.mxu0 0.0
    %1181 = vmatprep.subr.mxu0 0.0
    %1182 = vmatpush1.msra.mxu0 0.0
    %1183 = vmatprep.subr.mxu0 0.0
    %1184 = vmatpush1.msra.mxu0 0.0
    %1185 = vmatprep.subr.mxu0 0.0
    %1186 = vmatpush1.msra.mxu0 0.0
    %1187 = vmatprep.subr.mxu0 0.0
    %1188 = vmatpush1.msra.mxu0 0.0
    %1189 = vmatprep.subr.mxu0 0.0
    %1190 = vmatpush1.msra.mxu0 0.0
    %1191 = vmatprep.subr.mxu0 0.0
    %1192 = vmatpush1.msra.mxu0 0.0
    %1193 = vmatprep.subr.mxu0 0.0
    %1194 = vmatpush1.msra.mxu0 0.0
    %1195 = vmatprep.subr.mxu0 0.0
    %1196 = vmatpush1.msra.mxu0 0.0
    %1197 = vmatprep.subr.mxu0 0.0
    %1198 = vmatpush1.msra.mxu0 0.0
    %1199 = vmatprep.subr.mxu0 0.0
    %1200 = vmatpush1.msra.mxu0 0.0
    %1201 = vmatprep.subr.mxu0 0.0
    %1202 = vmatpush1.msra.mxu0 0.0
    %1203 = vmatprep.subr.mxu0 0.0
    %1204 = vmatpush1.msra.mxu0 0.0
    %1205 = vmatprep.subr.mxu0 0.0
    %1206 = vmatpush1.msra.mxu0 0.0
    %1207 = vmatprep.subr.mxu0 0.0
    %1208 = vmatpush1.msra.mxu0 0.0
    %1209 = vmatprep.subr.mxu0 0.0
    %1210 = vmatpush1.msra.mxu0 0.0
    %1211 = vmatprep.subr.mxu0 0.0
    %1212 = vmatpush1.msra.mxu0 0.0
    %1213 = vmatprep.mubr.f32.mxu0 0.0
    %1214 = vmatmul.mubr.f32.gmra.mrb[0].mxu0 %v1147
    %v1215 = vpop.f32.mrb[0].mxu0
    %v1216 = vadd.f32 0.0, %v1215
    %v1217 = vpop.f32.mrb[0].mxu0
    %1218 = vdwg.mxu0
    %1219 = vrot.lane.b32.xlu0 %v163, 64
    %v1220 = vpop.permute.xlu0 %1219
    %v1223 = vsel %vm172, %v903, 0
    %1225 = vmatprep.subr.mxu0 0.0
    %1226 = vmatpush1.msra.mxu0 %v1220
    %1227 = vmatprep.subr.mxu0 0.0
    %1228 = vmatpush1.msra.mxu0 0.0
    %1229 = vmatprep.subr.mxu0 0.0
    %1230 = vmatpush1.msra.mxu0 0.0
    %1231 = vmatprep.subr.mxu0 0.0
    %1232 = vmatpush1.msra.mxu0 0.0
    %1233 = vmatprep.subr.mxu0 0.0
    %1234 = vmatpush1.msra.mxu0 0.0
    %1235 = vmatprep.subr.mxu0 0.0
    %1236 = vmatpush1.msra.mxu0 0.0
    %1237 = vmatprep.subr.mxu0 0.0
    %1238 = vmatpush1.msra.mxu0 0.0
    %1239 = vmatprep.subr.mxu0 0.0
    %1240 = vmatpush1.msra.mxu0 0.0
    %1241 = vmatprep.subr.mxu0 0.0
    %1242 = vmatpush1.msra.mxu0 0.0
    %1243 = vmatprep.subr.mxu0 0.0
    %1244 = vmatpush1.msra.mxu0 0.0
    %1245 = vmatprep.subr.mxu0 0.0
    %1246 = vmatpush1.msra.mxu0 0.0
    %1247 = vmatprep.subr.mxu0 0.0
    %1248 = vmatpush1.msra.mxu0 0.0
    %1249 = vmatprep.subr.mxu0 0.0
    %1250 = vmatpush1.msra.mxu0 0.0
    %1251 = vmatprep.subr.mxu0 0.0
    %1252 = vmatpush1.msra.mxu0 0.0
    %1253 = vmatprep.subr.mxu0 0.0
    %1254 = vmatpush1.msra.mxu0 0.0
    %1255 = vmatprep.subr.mxu0 0.0
    %1256 = vmatpush1.msra.mxu0 0.0
    %1257 = vmatprep.subr.mxu0 0.0
    %1258 = vmatpush1.msra.mxu0 0.0
    %1259 = vmatprep.subr.mxu0 0.0
    %1260 = vmatpush1.msra.mxu0 0.0
    %1261 = vmatprep.subr.mxu0 0.0
    %1262 = vmatpush1.msra.mxu0 0.0
    %1263 = vmatprep.subr.mxu0 0.0
    %1264 = vmatpush1.msra.mxu0 0.0
    %1265 = vmatprep.subr.mxu0 0.0
    %1266 = vmatpush1.msra.mxu0 0.0
    %1267 = vmatprep.subr.mxu0 0.0
    %1268 = vmatpush1.msra.mxu0 0.0
    %1269 = vmatprep.subr.mxu0 0.0
    %1270 = vmatpush1.msra.mxu0 0.0
    %1271 = vmatprep.subr.mxu0 0.0
    %1272 = vmatpush1.msra.mxu0 0.0
    %1273 = vmatprep.subr.mxu0 0.0
    %1274 = vmatpush1.msra.mxu0 0.0
    %1275 = vmatprep.subr.mxu0 0.0
    %1276 = vmatpush1.msra.mxu0 0.0
    %1277 = vmatprep.subr.mxu0 0.0
    %1278 = vmatpush1.msra.mxu0 0.0
    %1279 = vmatprep.subr.mxu0 0.0
    %1280 = vmatpush1.msra.mxu0 0.0
    %1281 = vmatprep.subr.mxu0 0.0
    %1282 = vmatpush1.msra.mxu0 0.0
    %1283 = vmatprep.subr.mxu0 0.0
    %1284 = vmatpush1.msra.mxu0 0.0
    %1285 = vmatprep.subr.mxu0 0.0
    %1286 = vmatpush1.msra.mxu0 0.0
    %1287 = vmatprep.subr.mxu0 0.0
    %1288 = vmatpush1.msra.mxu0 0.0
    %1289 = vmatprep.mubr.f32.mxu0 0.0
    %1290 = vmatmul.mubr.f32.gmra.mrb[0].mxu0 %v1223
    %v1291 = vpop.f32.mrb[0].mxu0
    %v1292 = vadd.f32 0.0, %v1291
    %v1293 = vpop.f32.mrb[0].mxu0
    %1294 = vdwg.mxu0
    %1295 = vrot.lane.b32.xlu0 %v165, 64
    %v1296 = vpop.permute.xlu0 %1295
    %v1299 = vsel %vm172, %v904, 0
    %1301 = vmatprep.subr.mxu0 0.0
    %1302 = vmatpush1.msra.mxu0 %v1296
    %1303 = vmatprep.subr.mxu0 0.0
    %1304 = vmatpush1.msra.mxu0 0.0
    %1305 = vmatprep.subr.mxu0 0.0
    %1306 = vmatpush1.msra.mxu0 0.0
    %1307 = vmatprep.subr.mxu0 0.0
    %1308 = vmatpush1.msra.mxu0 0.0
    %1309 = vmatprep.subr.mxu0 0.0
    %1310 = vmatpush1.msra.mxu0 0.0
    %1311 = vmatprep.subr.mxu0 0.0
    %1312 = vmatpush1.msra.mxu0 0.0
    %1313 = vmatprep.subr.mxu0 0.0
    %1314 = vmatpush1.msra.mxu0 0.0
    %1315 = vmatprep.subr.mxu0 0.0
    %1316 = vmatpush1.msra.mxu0 0.0
    %1317 = vmatprep.subr.mxu0 0.0
    %1318 = vmatpush1.msra.mxu0 0.0
    %1319 = vmatprep.subr.mxu0 0.0
    %1320 = vmatpush1.msra.mxu0 0.0
    %1321 = vmatprep.subr.mxu0 0.0
    %1322 = vmatpush1.msra.mxu0 0.0
    %1323 = vmatprep.subr.mxu0 0.0
    %1324 = vmatpush1.msra.mxu0 0.0
    %1325 = vmatprep.subr.mxu0 0.0
    %1326 = vmatpush1.msra.mxu0 0.0
    %1327 = vmatprep.subr.mxu0 0.0
    %1328 = vmatpush1.msra.mxu0 0.0
    %1329 = vmatprep.subr.mxu0 0.0
    %1330 = vmatpush1.msra.mxu0 0.0
    %1331 = vmatprep.subr.mxu0 0.0
    %1332 = vmatpush1.msra.mxu0 0.0
    %1333 = vmatprep.subr.mxu0 0.0
    %1334 = vmatpush1.msra.mxu0 0.0
    %1335 = vmatprep.subr.mxu0 0.0
    %1336 = vmatpush1.msra.mxu0 0.0
    %1337 = vmatprep.subr.mxu0 0.0
    %1338 = vmatpush1.msra.mxu0 0.0
    %1339 = vmatprep.subr.mxu0 0.0
    %1340 = vmatpush1.msra.mxu0 0.0
    %1341 = vmatprep.subr.mxu0 0.0
    %1342 = vmatpush1.msra.mxu0 0.0
    %1343 = vmatprep.subr.mxu0 0.0
    %1344 = vmatpush1.msra.mxu0 0.0
    %1345 = vmatprep.subr.mxu0 0.0
    %1346 = vmatpush1.msra.mxu0 0.0
    %1347 = vmatprep.subr.mxu0 0.0
    %1348 = vmatpush1.msra.mxu0 0.0
    %1349 = vmatprep.subr.mxu0 0.0
    %1350 = vmatpush1.msra.mxu0 0.0
    %1351 = vmatprep.subr.mxu0 0.0
    %1352 = vmatpush1.msra.mxu0 0.0
    %1353 = vmatprep.subr.mxu0 0.0
    %1354 = vmatpush1.msra.mxu0 0.0
    %1355 = vmatprep.subr.mxu0 0.0
    %1356 = vmatpush1.msra.mxu0 0.0
    %1357 = vmatprep.subr.mxu0 0.0
    %1358 = vmatpush1.msra.mxu0 0.0
    %1359 = vmatprep.subr.mxu0 0.0
    %1360 = vmatpush1.msra.mxu0 0.0
    %1361 = vmatprep.subr.mxu0 0.0
    %1362 = vmatpush1.msra.mxu0 0.0
    %1363 = vmatprep.subr.mxu0 0.0
    %1364 = vmatpush1.msra.mxu0 0.0
    %1365 = vmatprep.mubr.f32.mxu0 0.0
    %1366 = vmatmul.mubr.f32.gmra.mrb[0].mxu0 %v1299
    %v1367 = vpop.f32.mrb[0].mxu0
    %v1368 = vadd.f32 0.0, %v1367
    %v1369 = vpop.f32.mrb[0].mxu0
    %1370 = vdwg.mxu0
    %1371 = vrot.lane.b32.xlu0 %v167, 64
    %v1372 = vpop.permute.xlu0 %1371
    %v1375 = vsel %vm172, %v905, 0
    %1377 = vmatprep.subr.mxu0 0.0
    %1378 = vmatpush1.msra.mxu0 %v1372
    %1379 = vmatprep.subr.mxu0 0.0
    %1380 = vmatpush1.msra.mxu0 0.0
    %1381 = vmatprep.subr.mxu0 0.0
    %1382 = vmatpush1.msra.mxu0 0.0
    %1383 = vmatprep.subr.mxu0 0.0
    %1384 = vmatpush1.msra.mxu0 0.0
    %1385 = vmatprep.subr.mxu0 0.0
    %1386 = vmatpush1.msra.mxu0 0.0
    %1387 = vmatprep.subr.mxu0 0.0
    %1388 = vmatpush1.msra.mxu0 0.0
    %1389 = vmatprep.subr.mxu0 0.0
    %1390 = vmatpush1.msra.mxu0 0.0
    %1391 = vmatprep.subr.mxu0 0.0
    %1392 = vmatpush1.msra.mxu0 0.0
    %1393 = vmatprep.subr.mxu0 0.0
    %1394 = vmatpush1.msra.mxu0 0.0
    %1395 = vmatprep.subr.mxu0 0.0
    %1396 = vmatpush1.msra.mxu0 0.0
    %1397 = vmatprep.subr.mxu0 0.0
    %1398 = vmatpush1.msra.mxu0 0.0
    %1399 = vmatprep.subr.mxu0 0.0
    %1400 = vmatpush1.msra.mxu0 0.0
    %1401 = vmatprep.subr.mxu0 0.0
    %1402 = vmatpush1.msra.mxu0 0.0
    %1403 = vmatprep.subr.mxu0 0.0
    %1404 = vmatpush1.msra.mxu0 0.0
    %1405 = vmatprep.subr.mxu0 0.0
    %1406 = vmatpush1.msra.mxu0 0.0
    %1407 = vmatprep.subr.mxu0 0.0
    %1408 = vmatpush1.msra.mxu0 0.0
    %1409 = vmatprep.subr.mxu0 0.0
    %1410 = vmatpush1.msra.mxu0 0.0
    %1411 = vmatprep.subr.mxu0 0.0
    %1412 = vmatpush1.msra.mxu0 0.0
    %1413 = vmatprep.subr.mxu0 0.0
    %1414 = vmatpush1.msra.mxu0 0.0
    %1415 = vmatprep.subr.mxu0 0.0
    %1416 = vmatpush1.msra.mxu0 0.0
    %1417 = vmatprep.subr.mxu0 0.0
    %1418 = vmatpush1.msra.mxu0 0.0
    %1419 = vmatprep.subr.mxu0 0.0
    %1420 = vmatpush1.msra.mxu0 0.0
    %1421 = vmatprep.subr.mxu0 0.0
    %1422 = vmatpush1.msra.mxu0 0.0
    %1423 = vmatprep.subr.mxu0 0.0
    %1424 = vmatpush1.msra.mxu0 0.0
    %1425 = vmatprep.subr.mxu0 0.0
    %1426 = vmatpush1.msra.mxu0 0.0
    %1427 = vmatprep.subr.mxu0 0.0
    %1428 = vmatpush1.msra.mxu0 0.0
    %1429 = vmatprep.subr.mxu0 0.0
    %1430 = vmatpush1.msra.mxu0 0.0
    %1431 = vmatprep.subr.mxu0 0.0
    %1432 = vmatpush1.msra.mxu0 0.0
    %1433 = vmatprep.subr.mxu0 0.0
    %1434 = vmatpush1.msra.mxu0 0.0
    %1435 = vmatprep.subr.mxu0 0.0
    %1436 = vmatpush1.msra.mxu0 0.0
    %1437 = vmatprep.subr.mxu0 0.0
    %1438 = vmatpush1.msra.mxu0 0.0
    %1439 = vmatprep.subr.mxu0 0.0
    %1440 = vmatpush1.msra.mxu0 0.0
    %1441 = vmatprep.mubr.f32.mxu0 0.0
    %1442 = vmatmul.mubr.f32.gmra.mrb[0].mxu0 %v1375
    %v1443 = vpop.f32.mrb[0].mxu0
    %v1444 = vadd.f32 0.0, %v1443
    %v1445 = vpop.f32.mrb[0].mxu0
    %1446 = vdwg.mxu0
    %1447 = vrot.lane.b32.xlu0 %v169, 64
    %v1448 = vpop.permute.xlu0 %1447
    %v1451 = vsel %vm172, %v906, 0
    %1453 = vmatprep.subr.mxu0 0.0
    %1454 = vmatpush1.msra.mxu0 %v1448
    %1455 = vmatprep.subr.mxu0 0.0
    %1456 = vmatpush1.msra.mxu0 0.0
    %1457 = vmatprep.subr.mxu0 0.0
    %1458 = vmatpush1.msra.mxu0 0.0
    %1459 = vmatprep.subr.mxu0 0.0
    %1460 = vmatpush1.msra.mxu0 0.0
    %1461 = vmatprep.subr.mxu0 0.0
    %1462 = vmatpush1.msra.mxu0 0.0
    %1463 = vmatprep.subr.mxu0 0.0
    %1464 = vmatpush1.msra.mxu0 0.0
    %1465 = vmatprep.subr.mxu0 0.0
    %1466 = vmatpush1.msra.mxu0 0.0
    %1467 = vmatprep.subr.mxu0 0.0
    %1468 = vmatpush1.msra.mxu0 0.0
    %1469 = vmatprep.subr.mxu0 0.0
    %1470 = vmatpush1.msra.mxu0 0.0
    %1471 = vmatprep.subr.mxu0 0.0
    %1472 = vmatpush1.msra.mxu0 0.0
    %1473 = vmatprep.subr.mxu0 0.0
    %1474 = vmatpush1.msra.mxu0 0.0
    %1475 = vmatprep.subr.mxu0 0.0
    %1476 = vmatpush1.msra.mxu0 0.0
    %1477 = vmatprep.subr.mxu0 0.0
    %1478 = vmatpush1.msra.mxu0 0.0
    %1479 = vmatprep.subr.mxu0 0.0
    %1480 = vmatpush1.msra.mxu0 0.0
    %1481 = vmatprep.subr.mxu0 0.0
    %1482 = vmatpush1.msra.mxu0 0.0
    %1483 = vmatprep.subr.mxu0 0.0
    %1484 = vmatpush1.msra.mxu0 0.0
    %1485 = vmatprep.subr.mxu0 0.0
    %1486 = vmatpush1.msra.mxu0 0.0
    %1487 = vmatprep.subr.mxu0 0.0
    %1488 = vmatpush1.msra.mxu0 0.0
    %1489 = vmatprep.subr.mxu0 0.0
    %1490 = vmatpush1.msra.mxu0 0.0
    %1491 = vmatprep.subr.mxu0 0.0
    %1492 = vmatpush1.msra.mxu0 0.0
    %1493 = vmatprep.subr.mxu0 0.0
    %1494 = vmatpush1.msra.mxu0 0.0
    %1495 = vmatprep.subr.mxu0 0.0
    %1496 = vmatpush1.msra.mxu0 0.0
    %1497 = vmatprep.subr.mxu0 0.0
    %1498 = vmatpush1.msra.mxu0 0.0
    %1499 = vmatprep.subr.mxu0 0.0
    %1500 = vmatpush1.msra.mxu0 0.0
    %1501 = vmatprep.subr.mxu0 0.0
    %1502 = vmatpush1.msra.mxu0 0.0
    %1503 = vmatprep.subr.mxu0 0.0
    %1504 = vmatpush1.msra.mxu0 0.0
    %1505 = vmatprep.subr.mxu0 0.0
    %1506 = vmatpush1.msra.mxu0 0.0
    %1507 = vmatprep.subr.mxu0 0.0
    %1508 = vmatpush1.msra.mxu0 0.0
    %1509 = vmatprep.subr.mxu0 0.0
    %1510 = vmatpush1.msra.mxu0 0.0
    %1511 = vmatprep.subr.mxu0 0.0
    %1512 = vmatpush1.msra.mxu0 0.0
    %1513 = vmatprep.subr.mxu0 0.0
    %1514 = vmatpush1.msra.mxu0 0.0
    %1515 = vmatprep.subr.mxu0 0.0
    %1516 = vmatpush1.msra.mxu0 0.0
    %1517 = vmatprep.mubr.f32.mxu0 0.0
    %1518 = vmatmul.mubr.f32.gmra.mrb[0].mxu0 %v1451
    %v1519 = vpop.f32.mrb[0].mxu0
    %v1520 = vadd.f32 0.0, %v1519
    %v1521 = vpop.f32.mrb[0].mxu0
    %1522 = vdwg.mxu0
    %1525 = vrot.lane.b32.xlu0 %v1140, 8
    %v1526 = vpop.permute.xlu0 %1525
    %1527 = vrot.lane.b32.xlu0 %v1216, 8
    %v1528 = vpop.permute.xlu0 %1527
    %1533 = vrot.lane.b32.xlu0 %v1292, 16
    %v1534 = vpop.permute.xlu0 %1533
    %1535 = vrot.lane.b32.xlu0 %v1368, 16
    %v1536 = vpop.permute.xlu0 %1535
    %1541 = vrot.lane.b32.xlu0 %v1444, 24
    %v1542 = vpop.permute.xlu0 %1541
    %1543 = vrot.lane.b32.xlu0 %v1520, 24
    %v1544 = vpop.permute.xlu0 %1543
    %v1547 = vsel %vm172, %v988, %v1526
    %v1548 = vsel %vm172, %v1064, %v1528
    %vm1549 = vcmask 130048
    %v1550 = vsel %vm1549, %v1547, %v1534
    %v1551 = vsel %vm1549, %v1548, %v1536
    %vm1552 = vcmask 195584
    %v1553 = vsel %vm1552, %v1550, %v1542
    %v1554 = vsel %vm1552, %v1551, %v1544
    %v1555 = vld [vmem:[%s4] sm:$0xff]
    %v1556 = vld [vmem:[%s4 + $0x8] sm:$0xff]
    %v1557 = vld [vmem:[%s4 + $0x10] sm:$0xff]
    %v1558 = vld [vmem:[%s4 + $0x18] sm:$0xff]
    %v1559 = vlaneseq
    %v1560 = vshrl.u32 %v1559, 7
    %v1561 = vsub.s32 0, %v1560
    %v1562 = vrot.slane %v62, %v1561
    %v1564 = vsel %vm74, %v1553, 0
    %v1567 = vsel %vm74, %v1554, 0
    %1569 = vmatprep.subr.mxu0 0.0
    %1570 = vmatpush1.msra.mxu0 %v1555
    %1571 = vmatprep.subr.mxu0 0.0
    %1572 = vmatpush1.msra.mxu0 %v1556
    %1573 = vmatprep.subr.mxu0 0.0
    %1574 = vmatpush1.msra.mxu0 %v1557
    %1575 = vmatprep.subr.mxu0 0.0
    %1576 = vmatpush1.msra.mxu0 %v1558
    %1577 = vmatprep.subr.mxu0 0.0
    %1578 = vmatpush1.msra.mxu0 0.0
    %1579 = vmatprep.subr.mxu0 0.0
    %1580 = vmatpush1.msra.mxu0 0.0
    %1581 = vmatprep.subr.mxu0 0.0
    %1582 = vmatpush1.msra.mxu0 0.0
    %1583 = vmatprep.subr.mxu0 0.0
    %1584 = vmatpush1.msra.mxu0 0.0
    %1585 = vmatprep.subr.mxu0 0.0
    %1586 = vmatpush1.msra.mxu0 0.0
    %1587 = vmatprep.subr.mxu0 0.0
    %1588 = vmatpush1.msra.mxu0 0.0
    %1589 = vmatprep.subr.mxu0 0.0
    %1590 = vmatpush1.msra.mxu0 0.0
    %1591 = vmatprep.subr.mxu0 0.0
    %1592 = vmatpush1.msra.mxu0 0.0
    %1593 = vmatprep.subr.mxu0 0.0
    %1594 = vmatpush1.msra.mxu0 0.0
    %1595 = vmatprep.subr.mxu0 0.0
    %1596 = vmatpush1.msra.mxu0 0.0
    %1597 = vmatprep.subr.mxu0 0.0
    %1598 = vmatpush1.msra.mxu0 0.0
    %1599 = vmatprep.subr.mxu0 0.0
    %1600 = vmatpush1.msra.mxu0 0.0
    %1601 = vmatprep.subr.mxu0 0.0
    %1602 = vmatpush1.msra.mxu0 0.0
    %1603 = vmatprep.subr.mxu0 0.0
    %1604 = vmatpush1.msra.mxu0 0.0
    %1605 = vmatprep.subr.mxu0 0.0
    %1606 = vmatpush1.msra.mxu0 0.0
    %1607 = vmatprep.subr.mxu0 0.0
    %1608 = vmatpush1.msra.mxu0 0.0
    %1609 = vmatprep.subr.mxu0 0.0
    %1610 = vmatpush1.msra.mxu0 0.0
    %1611 = vmatprep.subr.mxu0 0.0
    %1612 = vmatpush1.msra.mxu0 0.0
    %1613 = vmatprep.subr.mxu0 0.0
    %1614 = vmatpush1.msra.mxu0 0.0
    %1615 = vmatprep.subr.mxu0 0.0
    %1616 = vmatpush1.msra.mxu0 0.0
    %1617 = vmatprep.subr.mxu0 0.0
    %1618 = vmatpush1.msra.mxu0 0.0
    %1619 = vmatprep.subr.mxu0 0.0
    %1620 = vmatpush1.msra.mxu0 0.0
    %1621 = vmatprep.subr.mxu0 0.0
    %1622 = vmatpush1.msra.mxu0 0.0
    %1623 = vmatprep.subr.mxu0 0.0
    %1624 = vmatpush1.msra.mxu0 0.0
    %1625 = vmatprep.subr.mxu0 0.0
    %1626 = vmatpush1.msra.mxu0 0.0
    %1627 = vmatprep.subr.mxu0 0.0
    %1628 = vmatpush1.msra.mxu0 0.0
    %1629 = vmatprep.subr.mxu0 0.0
    %1630 = vmatpush1.msra.mxu0 0.0
    %1631 = vmatprep.subr.mxu0 0.0
    %1632 = vmatpush1.msra.mxu0 0.0
    %1633 = vmatprep.mubr.f32.mxu0 0.0
    %1634 = vmatmul.mubr.f32.gmra.mrb[0].mxu0 %v1564
    %v1635 = vpop.f32.mrb[0].mxu0
    %v1636 = vadd.f32 %v1562, %v1635
    %v1637 = vpop.f32.mrb[0].mxu0
    %1638 = vmatprep.mubr.f32.mxu0 0.0
    %1639 = vmatmul.mubr.f32.gmra.mrb[0].mxu0 %v1567
    %v1640 = vpop.f32.mrb[0].mxu0
    %v1641 = vadd.f32 %v1562, %v1640
    %v1642 = vpop.f32.mrb[0].mxu0
    %1643 = vdwg.mxu0
    %v1644 = vadd.f32 %v1636, %v60
    %v1645 = vadd.f32 %v1641, %v61
    %v1646 = vsel %vm74, %v1644, 0.0
    %1647 = vadd.xlane.f32.xlu0 %v1646
    %v1648 = vpop.xlane.xlu0 %1647
    %v1649 = vsel %vm74, %v1645, 0.0
    %1650 = vadd.xlane.f32.xlu0 %v1649
    %v1651 = vpop.xlane.xlu0 %1650
    %v1652 = vrcp.pop 32.0
    %v1653 = vmul.f32 %v1648, %v1652
    %v1654 = vmul.f32 %v1651, %v1652
    %v1655 = vsub.f32 %v1644, %v1653
    %v1656 = vsub.f32 %v1645, %v1654
    %v1657 = vmul.f32 %v1655, %v1655
    %v1658 = vmul.f32 %v1656, %v1656
    %v1659 = vsel %vm74, %v1657, 0.0
    %1660 = vadd.xlane.f32.xlu0 %v1659
    %v1661 = vpop.xlane.xlu0 %1660
    %v1662 = vsel %vm74, %v1658, 0.0
    %1663 = vadd.xlane.f32.xlu0 %v1662
    %v1664 = vpop.xlane.xlu0 %1663
    %v1665 = vmul.f32 %v1661, %v1652
    %v1666 = vmul.f32 %v1664, %v1652
    %v1667 = vadd.f32 %v1665, 1e-05
    %v1668 = vadd.f32 %v1666, 1e-05
    %v1669 = vrsqrt.pop %v1667
    %v1670 = vrsqrt.pop %v1668
    %v1671 = vmul.f32 %v1655, %v1669
    %v1672 = vmul.f32 %v1656, %v1670
    %v1673 = vlaneseq
    %v1674 = vshrl.u32 %v1673, 7
    %v1675 = vsub.s32 1, %v1674
    %v1676 = vrot.slane %v62, %v1675
    %v1677 = vmul.f32 %v1671, %v1676
    %v1678 = vmul.f32 %v1672, %v1676
    %v1679 = vlaneseq
    %v1680 = vshrl.u32 %v1679, 7
    %v1681 = vsub.s32 2, %v1680
    %v1682 = vrot.slane %v62, %v1681
    %v1683 = vadd.f32 %v1677, %v1682
    %v1684 = vadd.f32 %v1678, %v1682
    %v1685 = vld [vmem:[%s5] sm:$0xff]
    %v1686 = vld [vmem:[%s5 + $0x8] sm:$0xff]
    %v1687 = vld [vmem:[%s5 + $0x10] sm:$0xff]
    %v1688 = vld [vmem:[%s5 + $0x18] sm:$0xff]
    %v1689 = vlaneseq
    %v1690 = vshrl.u32 %v1689, 7
    %v1691 = vsub.s32 4, %v1690
    %v1692 = vrot.slane %v62, %v1691
    %v1694 = vsel %vm74, %v1683, 0
    %v1697 = vsel %vm74, %v1684, 0
    %1699 = vmatprep.subr.mxu0 0.0
    %1700 = vmatpush1.msra.mxu0 %v1685
    %1701 = vmatprep.subr.mxu0 0.0
    %1702 = vmatpush1.msra.mxu0 %v1686
    %1703 = vmatprep.subr.mxu0 0.0
    %1704 = vmatpush1.msra.mxu0 %v1687
    %1705 = vmatprep.subr.mxu0 0.0
    %1706 = vmatpush1.msra.mxu0 %v1688
    %1707 = vmatprep.subr.mxu0 0.0
    %1708 = vmatpush1.msra.mxu0 0.0
    %1709 = vmatprep.subr.mxu0 0.0
    %1710 = vmatpush1.msra.mxu0 0.0
    %1711 = vmatprep.subr.mxu0 0.0
    %1712 = vmatpush1.msra.mxu0 0.0
    %1713 = vmatprep.subr.mxu0 0.0
    %1714 = vmatpush1.msra.mxu0 0.0
    %1715 = vmatprep.subr.mxu0 0.0
    %1716 = vmatpush1.msra.mxu0 0.0
    %1717 = vmatprep.subr.mxu0 0.0
    %1718 = vmatpush1.msra.mxu0 0.0
    %1719 = vmatprep.subr.mxu0 0.0
    %1720 = vmatpush1.msra.mxu0 0.0
    %1721 = vmatprep.subr.mxu0 0.0
    %1722 = vmatpush1.msra.mxu0 0.0
    %1723 = vmatprep.subr.mxu0 0.0
    %1724 = vmatpush1.msra.mxu0 0.0
    %1725 = vmatprep.subr.mxu0 0.0
    %1726 = vmatpush1.msra.mxu0 0.0
    %1727 = vmatprep.subr.mxu0 0.0
    %1728 = vmatpush1.msra.mxu0 0.0
    %1729 = vmatprep.subr.mxu0 0.0
    %1730 = vmatpush1.msra.mxu0 0.0
    %1731 = vmatprep.subr.mxu0 0.0
    %1732 = vmatpush1.msra.mxu0 0.0
    %1733 = vmatprep.subr.mxu0 0.0
    %1734 = vmatpush1.msra.mxu0 0.0
    %1735 = vmatprep.subr.mxu0 0.0
    %1736 = vmatpush1.msra.mxu0 0.0
    %1737 = vmatprep.subr.mxu0 0.0
    %1738 = vmatpush1.msra.mxu0 0.0
    %1739 = vmatprep.subr.mxu0 0.0
    %1740 = vmatpush1.msra.mxu0 0.0
    %1741 = vmatprep.subr.mxu0 0.0
    %1742 = vmatpush1.msra.mxu0 0.0
    %1743 = vmatprep.subr.mxu0 0.0
    %1744 = vmatpush1.msra.mxu0 0.0
    %1745 = vmatprep.subr.mxu0 0.0
    %1746 = vmatpush1.msra.mxu0 0.0
    %1747 = vmatprep.subr.mxu0 0.0
    %1748 = vmatpush1.msra.mxu0 0.0
    %1749 = vmatprep.subr.mxu0 0.0
    %1750 = vmatpush1.msra.mxu0 0.0
    %1751 = vmatprep.subr.mxu0 0.0
    %1752 = vmatpush1.msra.mxu0 0.0
    %1753 = vmatprep.subr.mxu0 0.0
    %1754 = vmatpush1.msra.mxu0 0.0
    %1755 = vmatprep.subr.mxu0 0.0
    %1756 = vmatpush1.msra.mxu0 0.0
    %1757 = vmatprep.subr.mxu0 0.0
    %1758 = vmatpush1.msra.mxu0 0.0
    %1759 = vmatprep.subr.mxu0 0.0
    %1760 = vmatpush1.msra.mxu0 0.0
    %1761 = vmatprep.subr.mxu0 0.0
    %1762 = vmatpush1.msra.mxu0 0.0
    %1763 = vmatprep.mubr.f32.mxu0 0.0
    %1764 = vmatmul.mubr.f32.gmra.mrb[0].mxu0 %v1694
    %v1765 = vpop.f32.mrb[0].mxu0
    %v1766 = vadd.f32 %v1692, %v1765
    %v1767 = vpop.f32.mrb[0].mxu0
    %1768 = vmatprep.mubr.f32.mxu0 0.0
    %1769 = vmatmul.mubr.f32.gmra.mrb[0].mxu0 %v1697
    %v1770 = vpop.f32.mrb[0].mxu0
    %v1771 = vadd.f32 %v1692, %v1770
    %v1772 = vpop.f32.mrb[0].mxu0
    %1773 = vdwg.mxu0
    %v1774 = vmul.f32 %v1766, 0.5
    %v1775 = vmul.f32 %v1771, 0.5
    %v1776 = vmul.f32 %v1766, 0.70710677
    %v1777 = vmul.f32 %v1771, 0.70710677
    %v1778 = verf.f32.pop %v1776
    %v1779 = verf.f32.pop %v1777
    %v1780 = vadd.f32 %v1778, 1.0
    %v1781 = vadd.f32 %v1779, 1.0
    %v1782 = vmul.f32 %v1774, %v1780
    %v1783 = vmul.f32 %v1775, %v1781
    %v1784 = vld [vmem:[%s6] sm:$0xff]
    %v1785 = vld [vmem:[%s6 + $0x8] sm:$0xff]
    %v1786 = vld [vmem:[%s6 + $0x10] sm:$0xff]
    %v1787 = vld [vmem:[%s6 + $0x18] sm:$0xff]
    %v1788 = vld [vmem:[%s6 + $0x20] sm:$0xff]
    %v1789 = vld [vmem:[%s6 + $0x28] sm:$0xff]
    %v1790 = vld [vmem:[%s6 + $0x30] sm:$0xff]
    %v1791 = vld [vmem:[%s6 + $0x38] sm:$0xff]
    %v1792 = vlaneseq
    %v1793 = vshrl.u32 %v1792, 7
    %v1794 = vsub.s32 3, %v1793
    %v1795 = vrot.slane %v62, %v1794
    %vm1796 = vcmask 523264
    %v1798 = vsel %vm1796, %v1782, 0
    %v1801 = vsel %vm1796, %v1783, 0
    %1803 = vmatprep.subr.mxu0 0.0
    %1804 = vmatpush1.msra.mxu0 %v1784
    %1805 = vmatprep.subr.mxu0 0.0
    %1806 = vmatpush1.msra.mxu0 %v1785
    %1807 = vmatprep.subr.mxu0 0.0
    %1808 = vmatpush1.msra.mxu0 %v1786
    %1809 = vmatprep.subr.mxu0 0.0
    %1810 = vmatpush1.msra.mxu0 %v1787
    %1811 = vmatprep.subr.mxu0 0.0
    %1812 = vmatpush1.msra.mxu0 %v1788
    %1813 = vmatprep.subr.mxu0 0.0
    %1814 = vmatpush1.msra.mxu0 %v1789
    %1815 = vmatprep.subr.mxu0 0.0
    %1816 = vmatpush1.msra.mxu0 %v1790
    %1817 = vmatprep.subr.mxu0 0.0
    %1818 = vmatpush1.msra.mxu0 %v1791
    %1819 = vmatprep.subr.mxu0 0.0
    %1820 = vmatpush1.msra.mxu0 0.0
    %1821 = vmatprep.subr.mxu0 0.0
    %1822 = vmatpush1.msra.mxu0 0.0
    %1823 = vmatprep.subr.mxu0 0.0
    %1824 = vmatpush1.msra.mxu0 0.0
    %1825 = vmatprep.subr.mxu0 0.0
    %1826 = vmatpush1.msra.mxu0 0.0
    %1827 = vmatprep.subr.mxu0 0.0
    %1828 = vmatpush1.msra.mxu0 0.0
    %1829 = vmatprep.subr.mxu0 0.0
    %1830 = vmatpush1.msra.mxu0 0.0
    %1831 = vmatprep.subr.mxu0 0.0
    %1832 = vmatpush1.msra.mxu0 0.0
    %1833 = vmatprep.subr.mxu0 0.0
    %1834 = vmatpush1.msra.mxu0 0.0
    %1835 = vmatprep.subr.mxu0 0.0
    %1836 = vmatpush1.msra.mxu0 0.0
    %1837 = vmatprep.subr.mxu0 0.0
    %1838 = vmatpush1.msra.mxu0 0.0
    %1839 = vmatprep.subr.mxu0 0.0
    %1840 = vmatpush1.msra.mxu0 0.0
    %1841 = vmatprep.subr.mxu0 0.0
    %1842 = vmatpush1.msra.mxu0 0.0
    %1843 = vmatprep.subr.mxu0 0.0
    %1844 = vmatpush1.msra.mxu0 0.0
    %1845 = vmatprep.subr.mxu0 0.0
    %1846 = vmatpush1.msra.mxu0 0.0
    %1847 = vmatprep.subr.mxu0 0.0
    %1848 = vmatpush1.msra.mxu0 0.0
    %1849 = vmatprep.subr.mxu0 0.0
    %1850 = vmatpush1.msra.mxu0 0.0
    %1851 = vmatprep.subr.mxu0 0.0
    %1852 = vmatpush1.msra.mxu0 0.0
    %1853 = vmatprep.subr.mxu0 0.0
    %1854 = vmatpush1.msra.mxu0 0.0
    %1855 = vmatprep.subr.mxu0 0.0
    %1856 = vmatpush1.msra.mxu0 0.0
    %1857 = vmatprep.subr.mxu0 0.0
    %1858 = vmatpush1.msra.mxu0 0.0
    %1859 = vmatprep.subr.mxu0 0.0
    %1860 = vmatpush1.msra.mxu0 0.0
    %1861 = vmatprep.subr.mxu0 0.0
    %1862 = vmatpush1.msra.mxu0 0.0
    %1863 = vmatprep.subr.mxu0 0.0
    %1864 = vmatpush1.msra.mxu0 0.0
    %1865 = vmatprep.subr.mxu0 0.0
    %1866 = vmatpush1.msra.mxu0 0.0
    %1867 = vmatprep.mubr.f32.mxu0 0.0
    %1868 = vmatmul.mubr.f32.gmra.mrb[0].mxu0 %v1798
    %v1869 = vpop.f32.mrb[0].mxu0
    %v1870 = vadd.f32 %v1795, %v1869
    %v1871 = vpop.f32.mrb[0].mxu0
    %1872 = vmatprep.mubr.f32.mxu0 0.0
    %1873 = vmatmul.mubr.f32.gmra.mrb[0].mxu0 %v1801
    %v1874 = vpop.f32.mrb[0].mxu0
    %v1875 = vadd.f32 %v1795, %v1874
    %v1876 = vpop.f32.mrb[0].mxu0
    %1877 = vdwg.mxu0
    %1878 = vst.msk [vmem:[#allocation7] sm:$0xff] %vm74, %v1870
    %1879 = vst.msk [vmem:[#allocation7 + $0x8] sm:$0xff] %vm74, %v1875
    // Predicated region
    $region42: #{encoder_layer.1} parent=1 // pred_check
      _
    $region43: #{encoder_layer.1} parent=1 // pred_check_branch
      %1881 = sbr.rel (0) target = $region45
    $region44: #{encoder_layer.1} parent=1 // pred_region
      %s1883 = ssub.s32 256, 256
      %1884 = vsyncadd [#allocation4], %s1883
      %s1885 = sshll.u32 [#allocation7], 4
      %s1886 = int_to_ptr.vmem [resolvable:$true] %s1885
      %1891 = dma.vmem_to_hbm [thread:$0]  %s1886, 256, %s8, [#allocation4], 128, 128, 8
    $region45: #{encoder_layer.1} parent=1 // pred_fallthru
      _
    // Predicated region
    $region46: #{encoder_layer.1} parent=1 // pred_check
      _
    $region47: #{encoder_layer.1} parent=1 // pred_check_branch
      %1893 = sbr.rel (0) target = $region49
    $region48: #{encoder_layer.1} parent=1 // pred_region
      _
    $region49: #{encoder_layer.1} parent=1 // pred_fallthru
      _
    // Predicated region
    $region50: #{encoder_layer.1} parent=1 // pred_check
      _
    $region51: #{encoder_layer.1} parent=1 // pred_check_branch
      %1895 = sbr.rel (0) target = $region53
    $region52: #{encoder_layer.1} parent=1 // pred_region
      %1896 = dma.done [#allocation4], 256
    $region53: #{encoder_layer.1} parent=1 // pred_fallthru
      _
    // Predicated region
    $region54: #{encoder_layer.1} parent=1 // pred_check
      _
    $region55: #{encoder_layer.1} parent=1 // pred_check_branch
      %1898 = sbr.rel (0) target = $region57
    $region56: #{encoder_layer.1} parent=1 // pred_region
      _
    $region57: #{encoder_layer.1} parent=1 // pred_fallthru
      _
    %1899 = vsyncpa [#allocation3], 1
    %1900 = vsyncpa [#allocation6], 1
    %1901 = vsyncpa [#allocation4], 1

</llo_original>
